<compile_context>
chip_gen: v5e
topology: v5e:2x2
jax: 0.10.0
libtpu: 0.0.40
codegen_flags: <defaults>
</compile_context>

<pallas_src>
import math

import jax
import jax.numpy as jnp
from jax.experimental import pallas as pl
from jax.experimental.pallas import tpu as pltpu

LN_EPS = 1e-5
L_DIM = 512   # self.L
D_DIM = 128   # self.D
K_DIM = 1     # self.K
NEG_BIG = -1e30
SQRT_2_OVER_PI = 0.7978845608028654


def _gelu_tanh(x):
    # tanh-approximate GELU: ~6 VALU + 1 EUP per element (vs ~15 VALU + 2 EUP for the
    # erf polynomial); |err| vs torch's exact erf GELU <= ~1e-3, inside the bf16-level
    # kernel tolerance.
    return 0.5 * x * (1.0 + jnp.tanh(SQRT_2_OVER_PI * (x + 0.044715 * (x * x * x))))


def _elementwise_dtype():
    """bf16 elementwise on chips with bf16 VALU/EUP (v6e / v7x), f32 elsewhere (v5e...)."""
    try:
        kind = jax.devices()[0].device_kind.lower()
    except Exception:
        return jnp.float32
    if any(tag in kind for tag in ("v6", "v7", "6e", "7x")):
        return jnp.bfloat16
    return jnp.float32


def _round_up(v, m):
    return ((v + m - 1) // m) * m


def _make_kernel(n_valid, tn, bb, n_pad, elem_dtype):
    """n_valid: true instances per bag; tn: instance tile; bb: bags fused per grid step."""
    masked = (n_pad != n_valid)   # trace-time skip of the pad mask when N is tile-aligned
    rows = bb * tn

    def kernel(x_ref, g1_ref, be1_ref, w1_ref, b1_ref,
               g2_ref, be2_ref, wa_ref, ba_ref, wv_ref, bv_ref,
               out_ref, m_sc, l_sc, acc_sc):
        n_idx = pl.program_id(1)

        @pl.when(n_idx == 0)
        def _init():
            m_sc[...] = jnp.full_like(m_sc, NEG_BIG)
            l_sc[...] = jnp.zeros_like(l_sc)
            acc_sc[...] = jnp.zeros_like(acc_sc)

        # ----- feature head: LN -> GELU -> Linear(Din,512) -> LN -> GELU (dropout = id) --
        x = x_ref[...].reshape(rows, x_ref.shape[-1]).astype(jnp.float32)   # (rows, Din)

        mu1 = jnp.mean(x, axis=-1, keepdims=True)
        d1 = x - mu1                                             # reused for var + norm
        var1 = jnp.mean(d1 * d1, axis=-1, keepdims=True)
        n1 = (d1 * jax.lax.rsqrt(var1 + LN_EPS)).astype(elem_dtype)
        h = _gelu_tanh(n1 * g1_ref[...] + be1_ref[...])          # elementwise in elem_dtype

        f_pre = jnp.dot(h.astype(jnp.bfloat16), w1_ref[...],    # bf16 MXU, f32 acc
                        preferred_element_type=jnp.float32) + b1_ref[...]   # (rows, L)

        mu2 = jnp.mean(f_pre, axis=-1, keepdims=True)
        d2 = f_pre - mu2
        var2 = jnp.mean(d2 * d2, axis=-1, keepdims=True)
        n2 = (d2 * jax.lax.rsqrt(var2 + LN_EPS)).astype(elem_dtype)
        f_bf = _gelu_tanh(n2 * g2_ref[...] + be2_ref[...]).astype(jnp.bfloat16)  # (rows, L)

        # ----- gated attention scores: Linear(L,D) -> tanh -> Linear(D,1), both on MXU --
        a = jnp.tanh((jnp.dot(f_bf, wa_ref[...], preferred_element_type=jnp.float32)
                      + ba_ref[...]).astype(elem_dtype))                    # (rows, D)
        s = jnp.dot(a.astype(jnp.bfloat16), wv_ref[...],
                    preferred_element_type=jnp.float32) + bv_ref[...]       # (rows, 1) f32

        if masked:
            row_in_bag = n_idx * tn + jax.lax.broadcasted_iota(jnp.int32, (tn, 1), 0)
            pad_mask = row_in_bag < n_valid                      # shared by all fused bags

        # ----- per-bag online softmax over the tiled instance axis (f32 bookkeeping) ----
        for bi in range(bb):                                     # static, bb <= 16
            s_b = s[bi * tn:(bi + 1) * tn]                       # (tn, 1), aligned slice
            if masked:
                s_b = jnp.where(pad_mask, s_b, NEG_BIG)
            m_prev = m_sc[bi]                                    # (1, 1)
            m_new = jnp.maximum(m_prev, jnp.max(s_b, axis=0, keepdims=True))
            alpha = jnp.exp(m_prev - m_new)
            p_b = jnp.exp(s_b - m_new)                           # (tn, 1); padded rows -> 0
            l_sc[bi] = alpha * l_sc[bi] + jnp.sum(p_b, axis=0, keepdims=True)
            # weighted feature sum on the (idle) MXU instead of TN*512 VALU mults + XLU
            acc_sc[bi] = alpha * acc_sc[bi] + jnp.dot(
                p_b.reshape(1, tn).astype(jnp.bfloat16),
                f_bf[bi * tn:(bi + 1) * tn],
                preferred_element_type=jnp.float32)              # (1, L)
            m_sc[bi] = m_new

        @pl.when(n_idx == pl.num_programs(1) - 1)
        def _finish():
            out_ref[...] = (acc_sc[...] * (1.0 / l_sc[...])).astype(out_ref.dtype)

    return kernel


def hyperagg_forward(x, params, *, tn_max=1024):
    """x: (B, N, D_in) float32.  Returns (B, 1, 512)."""
    B, N, D_in = x.shape
    L = params["w1"].shape[1]
    out_dtype = x.dtype
    elem_dtype = _elementwise_dtype()

    # Tile the instance axis; TN <= 1024 keeps resident VMEM well under the scoped limit
    # on every generation (incl. v7x 64 MiB physical / 32 MiB scoped).
    tn = min(tn_max, _round_up(N, 8))
    n_pad = _round_up(N, tn)
    n_tiles = n_pad // tn

    # Small-bag fusion: when a whole bag fits in one tile, pack BB bags per grid step so
    # the matmul M dimension fills the MXU and the per-step overhead is amortized.
    bb = 1
    if n_tiles == 1:
        bb = max(1, min(B, 512 // max(n_pad, 1), 16))
    b_pad = _round_up(B, bb)

    if n_pad != N:
        x = jnp.pad(x, ((0, 0), (0, n_pad - N), (0, 0)))   # zero rows, masked in-kernel
    if b_pad != B:
        x = jnp.pad(x, ((0, b_pad - B), (0, 0), (0, 0)))   # zero bags, sliced off after

    # x is essentially all of the HBM traffic -> ship it bf16 (halves the DMA and the
    # double-buffered x VMEM); upcast to f32 inside the kernel for the LN statistics.
    x = x.astype(jnp.bfloat16)

    # bf16 MXU operands (f32 accumulation inside the kernel).
    w1 = params["w1"].astype(jnp.bfloat16)
    wa = params["wa"].astype(jnp.bfloat16)
    wv = params["wv"].reshape(-1, 1).astype(jnp.bfloat16)   # (D, 1) column for MXU score

    consts = [params["ln1_g"].astype(elem_dtype), params["ln1_b"].astype(elem_dtype),
              w1, params["b1"],
              params["ln2_g"].astype(elem_dtype), params["ln2_b"].astype(elem_dtype),
              wa, params["ba"], wv, params["bv"]]

    def _const_spec(a):
        nd = a.ndim
        # Constant block index -> Mosaic only DMAs these once per resident block.
        return pl.BlockSpec(a.shape, lambda g, n, _nd=nd: (0,) * _nd)

    in_specs = [pl.BlockSpec((bb, tn, D_in), lambda g, n: (g, n, 0))]
    in_specs += [_const_spec(a) for a in consts]
    out_spec = pl.BlockSpec((bb, 1, L), lambda g, n: (g, 0, 0))

    kernel = _make_kernel(n_valid=N, tn=tn, bb=bb, n_pad=n_pad, elem_dtype=elem_dtype)

    out = pl.pallas_call(
        kernel,
        out_shape=jax.ShapeDtypeStruct((b_pad, 1, L), out_dtype),
        grid_spec=pltpu.PrefetchScalarGridSpec(
            num_scalar_prefetch=0,
            grid=(b_pad // bb, n_tiles),
            in_specs=in_specs,
            out_specs=out_spec,
            scratch_shapes=[
                pltpu.VMEM((bb, 1, 1), jnp.float32),   # per-bag running max
                pltpu.VMEM((bb, 1, 1), jnp.float32),   # per-bag softmax denominator
                pltpu.VMEM((bb, 1, L), jnp.float32),   # per-bag weighted-sum accumulator
            ],
        ),
        compiler_params=pltpu.CompilerParams(
            dimension_semantics=("parallel", "arbitrary"),
            vmem_limit_bytes=32 * 1024 * 1024),
    )(x, *consts)

    if b_pad != B:
        out = out[:B]
    return out


def init_params(key, input_dim):
    """Deterministic synthetic init matching the module's initialize_weights():
    Linear: xavier_normal weight, zero bias.  LayerNorm: weight=1, bias=0."""
    k1, k2, k3 = jax.random.split(key, 3)

    def xavier(k, fan_out, fan_in):
        std = math.sqrt(2.0 / (fan_in + fan_out))
        return jax.random.normal(k, (fan_out, fan_in), dtype=jnp.float32) * std

    w1 = xavier(k1, L_DIM, input_dim).T          # stored (D_in, L) for x @ W
    wa = xavier(k2, D_DIM, L_DIM).T              # stored (L, D)
    wv = xavier(k3, K_DIM, D_DIM)                # (1, D)

    return {
        "ln1_g": jnp.ones((1, input_dim), jnp.float32),
        "ln1_b": jnp.zeros((1, input_dim), jnp.float32),
        "w1": w1.astype(jnp.float32),
        "b1": jnp.zeros((1, L_DIM), jnp.float32),
        "ln2_g": jnp.ones((1, L_DIM), jnp.float32),
        "ln2_b": jnp.zeros((1, L_DIM), jnp.float32),
        "wa": wa.astype(jnp.float32),
        "ba": jnp.zeros((1, D_DIM), jnp.float32),
        "wv": wv.astype(jnp.float32),
        "bv": jnp.zeros((1, 1), jnp.float32),
    }


def hyperagg_reference(x, p):
    """Pure-JAX f32 reference (exact erf GELU, matches the PyTorch module)."""
    def ln(v, g, b):
        mu = jnp.mean(v, axis=-1, keepdims=True)
        var = jnp.mean(jnp.square(v - mu), axis=-1, keepdims=True)
        return (v - mu) * jax.lax.rsqrt(var + LN_EPS) * g + b

    h = jax.nn.gelu(ln(x, p["ln1_g"], p["ln1_b"]), approximate=False)
    f = h @ p["w1"] + p["b1"]
    f = jax.nn.gelu(ln(f, p["ln2_g"], p["ln2_b"]), approximate=False)
    s = jnp.sum(jnp.tanh(f @ p["wa"] + p["ba"]) * p["wv"], axis=-1, keepdims=True) + p["bv"]
    A = jnp.swapaxes(s, -1, -2)                  # (B, 1, N)
    A = jax.nn.softmax(A, axis=-1)
    return jnp.einsum("bkn,bnl->bkl", A, f)      # (B, 1, L)


if __name__ == "__main__":
    key = jax.random.PRNGKey(0)
    kx, kp, kx2 = jax.random.split(key, 3)

    B, N, D_in = 2, 24, 512     # input_dim must equal 512 (see NOTE at top)
    x = jax.random.normal(kx, (B, N, D_in), dtype=jnp.float32)
    params = init_params(kp, D_in)

    ref = hyperagg_reference(x, params)

    # Multi-tile path: TN=16 -> N padded 24->32, two tiles per bag; exercises the
    # online-softmax accumulation and the padded-row masking (bb = 1).
    out_tiled = hyperagg_forward(x, params, tn_max=16)
    jax.block_until_ready(out_tiled)

    # Single-tile path with small-bag fusion (bb = 2 bags per grid step).
    out_fused = hyperagg_forward(x, params)
    jax.block_until_ready(out_fused)

    assert out_tiled.shape == (B, K_DIM, L_DIM), out_tiled.shape
    assert out_fused.shape == (B, K_DIM, L_DIM), out_fused.shape

    # bf16 x / bf16 MXU operands / bf16 elementwise (on v6e+) + tanh-GELU vs the exact
    # erf-GELU f32 reference -> bf16-level tolerance.
    TOL = 3e-2
    for out in (out_tiled, out_fused):
        if not jnp.allclose(out, ref, atol=TOL, rtol=TOL):
            err = float(jnp.max(jnp.abs(out - ref)))
            raise AssertionError(f"Pallas kernel mismatches reference (max abs err {err})")

    # Bag-fusion + batch-padding + row-masking path: N=100 -> padded to 104, bb=4 does
    # not divide B=5 -> batch padded to 8 and sliced back.
    B2, N2 = 5, 100
    x2 = jax.random.normal(kx2, (B2, N2, D_in), dtype=jnp.float32)
    ref2 = hyperagg_reference(x2, params)
    out2 = hyperagg_forward(x2, params)
    jax.block_until_ready(out2)
    assert out2.shape == (B2, K_DIM, L_DIM), out2.shape
    if not jnp.allclose(out2, ref2, atol=TOL, rtol=TOL):
        err = float(jnp.max(jnp.abs(out2 - ref2)))
        raise AssertionError(f"Pallas kernel mismatches reference (max abs err {err})")

    print("KERNEL_OK")
</pallas_src>

<mosaic_0001>
module attributes {stable_mosaic.version = 11 : i64} {
  func.func @kernel(%arg0: i32, %arg1: i32, %arg2: memref<1x16x512xbf16, #tpu.memory_space<vmem>>, %arg3: memref<1x512xf32, #tpu.memory_space<vmem>>, %arg4: memref<1x512xf32, #tpu.memory_space<vmem>>, %arg5: memref<512x512xbf16, #tpu.memory_space<vmem>>, %arg6: memref<1x512xf32, #tpu.memory_space<vmem>>, %arg7: memref<1x512xf32, #tpu.memory_space<vmem>>, %arg8: memref<1x512xf32, #tpu.memory_space<vmem>>, %arg9: memref<512x128xbf16, #tpu.memory_space<vmem>>, %arg10: memref<1x128xf32, #tpu.memory_space<vmem>>, %arg11: memref<128x1xbf16, #tpu.memory_space<vmem>>, %arg12: memref<1x1xf32, #tpu.memory_space<vmem>>, %arg13: memref<1x1x512xf32, #tpu.memory_space<vmem>>, %arg14: memref<1x1x1xf32, #tpu.memory_space<vmem>>, %arg15: memref<1x1x1xf32, #tpu.memory_space<vmem>>, %arg16: memref<1x1x512xf32, #tpu.memory_space<vmem>>) attributes {dimension_semantics = [#tpu.dimension_semantics<parallel>, #tpu.dimension_semantics<arbitrary>], iteration_bounds = array<i64: 2, 2>, scalar_prefetch = 0 : i64, scratch_operands = 3 : i64, tpu.core_type = #tpu.core_type<tc>, window_params = [{transform_indices = @transform_0, window_bounds = array<i64: 1, 16, 512>}, {pipeline_mode = #tpu.pipeline_mode<synchronous>, transform_indices = @transform_1, window_bounds = array<i64: 1, 512>}, {pipeline_mode = #tpu.pipeline_mode<synchronous>, transform_indices = @transform_2, window_bounds = array<i64: 1, 512>}, {pipeline_mode = #tpu.pipeline_mode<synchronous>, transform_indices = @transform_3, window_bounds = array<i64: 512, 512>}, {pipeline_mode = #tpu.pipeline_mode<synchronous>, transform_indices = @transform_4, window_bounds = array<i64: 1, 512>}, {pipeline_mode = #tpu.pipeline_mode<synchronous>, transform_indices = @transform_5, window_bounds = array<i64: 1, 512>}, {pipeline_mode = #tpu.pipeline_mode<synchronous>, transform_indices = @transform_6, window_bounds = array<i64: 1, 512>}, {pipeline_mode = #tpu.pipeline_mode<synchronous>, transform_indices = @transform_7, window_bounds = array<i64: 512, 128>}, {pipeline_mode = #tpu.pipeline_mode<synchronous>, transform_indices = @transform_8, window_bounds = array<i64: 1, 128>}, {pipeline_mode = #tpu.pipeline_mode<synchronous>, transform_indices = @transform_9, window_bounds = array<i64: 128, 1>}, {pipeline_mode = #tpu.pipeline_mode<synchronous>, transform_indices = @transform_10, window_bounds = array<i64: 1, 1>}, {transform_indices = @transform_11, window_bounds = array<i64: 1, 1, 512>}]} {
    %c0_i32 = arith.constant 0 : i32
    %0 = arith.cmpi eq, %arg1, %c0_i32 : i32
    %1 = arith.extui %0 : i1 to i32
    %c0_i32_0 = arith.constant 0 : i32
    %2 = arith.cmpi ne, %1, %c0_i32_0 : i32
    scf.if %2 {
      %cst_66 = arith.constant -1.000000e+30 : f32
      %139 = vector.broadcast %cst_66 : f32 to vector<1x1x1xf32>
      %c0_67 = arith.constant 0 : index
      %c0_68 = arith.constant 0 : index
      %c0_69 = arith.constant 0 : index
      %140 = vector.load %arg14[%c0_67, %c0_68, %c0_69] : memref<1x1x1xf32, #tpu.memory_space<vmem>>, vector<1x1x1xf32>
      tpu.vector_store %arg14[%c0_67, %c0_68, %c0_69], %139 {strides = array<i32>} : memref<1x1x1xf32, #tpu.memory_space<vmem>>, vector<1x1x1xf32>,
      %cst_70 = arith.constant 0.000000e+00 : f32
      %141 = vector.broadcast %cst_70 : f32 to vector<1x1x1xf32>
      %c0_71 = arith.constant 0 : index
      %c0_72 = arith.constant 0 : index
      %c0_73 = arith.constant 0 : index
      %142 = vector.load %arg15[%c0_71, %c0_72, %c0_73] : memref<1x1x1xf32, #tpu.memory_space<vmem>>, vector<1x1x1xf32>
      tpu.vector_store %arg15[%c0_71, %c0_72, %c0_73], %141 {strides = array<i32>} : memref<1x1x1xf32, #tpu.memory_space<vmem>>, vector<1x1x1xf32>,
      %cst_74 = arith.constant 0.000000e+00 : f32
      %143 = vector.broadcast %cst_74 : f32 to vector<1x1x512xf32>
      %c0_75 = arith.constant 0 : index
      %c0_76 = arith.constant 0 : index
      %c0_77 = arith.constant 0 : index
      %144 = vector.load %arg16[%c0_75, %c0_76, %c0_77] : memref<1x1x512xf32, #tpu.memory_space<vmem>>, vector<1x1x512xf32>
      tpu.vector_store %arg16[%c0_75, %c0_76, %c0_77], %143 {strides = array<i32>} : memref<1x1x512xf32, #tpu.memory_space<vmem>>, vector<1x1x512xf32>,
    } else {
    }
    %c0 = arith.constant 0 : index
    %c0_1 = arith.constant 0 : index
    %c0_2 = arith.constant 0 : index
    %3 = vector.load %arg2[%c0, %c0_1, %c0_2] : memref<1x16x512xbf16, #tpu.memory_space<vmem>>, vector<1x16x512xbf16>
    %4 = vector.shape_cast %3 : vector<1x16x512xbf16> to vector<16x512xbf16>
    %5 = arith.extf %4 : vector<16x512xbf16> to vector<16x512xf32>
    %cst = arith.constant dense<0.000000e+00> : vector<16xf32>
    %6 = vector.multi_reduction <add>, %5, %cst [1] : vector<16x512xf32> to vector<16xf32>
    %7 = vector.shape_cast %6 : vector<16xf32> to vector<16x1xf32>
    %cst_3 = arith.constant 5.120000e+02 : f32
    %8 = vector.broadcast %cst_3 : f32 to vector<16x1xf32>
    %9 = arith.divf %7, %8 : vector<16x1xf32>
    %10 = vector.broadcast %9 : vector<16x1xf32> to vector<16x512xf32>
    %11 = arith.subf %5, %10 : vector<16x512xf32>
    %12 = arith.mulf %11, %11 : vector<16x512xf32>
    %cst_4 = arith.constant dense<0.000000e+00> : vector<16xf32>
    %13 = vector.multi_reduction <add>, %12, %cst_4 [1] : vector<16x512xf32> to vector<16xf32>
    %14 = vector.shape_cast %13 : vector<16xf32> to vector<16x1xf32>
    %cst_5 = arith.constant 5.120000e+02 : f32
    %15 = vector.broadcast %cst_5 : f32 to vector<16x1xf32>
    %16 = arith.divf %14, %15 : vector<16x1xf32>
    %cst_6 = arith.constant 9.99999974E-6 : f32
    %17 = vector.broadcast %cst_6 : f32 to vector<16x1xf32>
    %18 = arith.addf %16, %17 : vector<16x1xf32>
    %19 = math.rsqrt %18 : vector<16x1xf32>
    %20 = vector.broadcast %19 : vector<16x1xf32> to vector<16x512xf32>
    %21 = arith.mulf %11, %20 : vector<16x512xf32>
    %c0_7 = arith.constant 0 : index
    %c0_8 = arith.constant 0 : index
    %22 = vector.load %arg3[%c0_7, %c0_8] : memref<1x512xf32, #tpu.memory_space<vmem>>, vector<1x512xf32>
    %23 = vector.broadcast %22 : vector<1x512xf32> to vector<16x512xf32>
    %24 = arith.mulf %21, %23 : vector<16x512xf32>
    %c0_9 = arith.constant 0 : index
    %c0_10 = arith.constant 0 : index
    %25 = vector.load %arg4[%c0_9, %c0_10] : memref<1x512xf32, #tpu.memory_space<vmem>>, vector<1x512xf32>
    %26 = vector.broadcast %25 : vector<1x512xf32> to vector<16x512xf32>
    %27 = arith.addf %24, %26 : vector<16x512xf32>
    %cst_11 = arith.constant 5.000000e-01 : f32
    %28 = vector.broadcast %cst_11 : f32 to vector<16x512xf32>
    %29 = arith.mulf %28, %27 : vector<16x512xf32>
    %30 = arith.mulf %27, %27 : vector<16x512xf32>
    %31 = arith.mulf %30, %27 : vector<16x512xf32>
    %cst_12 = arith.constant 4.471500e-02 : f32
    %32 = vector.broadcast %cst_12 : f32 to vector<16x512xf32>
    %33 = arith.mulf %32, %31 : vector<16x512xf32>
    %34 = arith.addf %27, %33 : vector<16x512xf32>
    %cst_13 = arith.constant 0.797884583 : f32
    %35 = vector.broadcast %cst_13 : f32 to vector<16x512xf32>
    %36 = arith.mulf %35, %34 : vector<16x512xf32>
    %37 = math.tanh %36 : vector<16x512xf32>
    %cst_14 = arith.constant 1.000000e+00 : f32
    %38 = vector.broadcast %cst_14 : f32 to vector<16x512xf32>
    %39 = arith.addf %38, %37 : vector<16x512xf32>
    %40 = arith.mulf %29, %39 : vector<16x512xf32>
    %41 = arith.truncf %40 : vector<16x512xf32> to vector<16x512xbf16>
    %c0_15 = arith.constant 0 : index
    %c0_16 = arith.constant 0 : index
    %42 = vector.load %arg5[%c0_15, %c0_16] : memref<512x512xbf16, #tpu.memory_space<vmem>>, vector<512x512xbf16>
    %cst_17 = arith.constant dense<0.000000e+00> : vector<16x512xf32>
    %43 = tpu.matmul %41, %42, %cst_17 {dimension_numbers = #tpu.dot_dimension_numbers<[1], [0], [0], [1], [0, 0, 1, 1], [], []>} : vector<16x512xbf16>, vector<512x512xbf16>, vector<16x512xf32> -> vector<16x512xf32>
    %c0_18 = arith.constant 0 : index
    %c0_19 = arith.constant 0 : index
    %44 = vector.load %arg6[%c0_18, %c0_19] : memref<1x512xf32, #tpu.memory_space<vmem>>, vector<1x512xf32>
    %45 = vector.broadcast %44 : vector<1x512xf32> to vector<16x512xf32>
    %46 = arith.addf %43, %45 : vector<16x512xf32>
    %cst_20 = arith.constant dense<0.000000e+00> : vector<16xf32>
    %47 = vector.multi_reduction <add>, %46, %cst_20 [1] : vector<16x512xf32> to vector<16xf32>
    %48 = vector.shape_cast %47 : vector<16xf32> to vector<16x1xf32>
    %cst_21 = arith.constant 5.120000e+02 : f32
    %49 = vector.broadcast %cst_21 : f32 to vector<16x1xf32>
    %50 = arith.divf %48, %49 : vector<16x1xf32>
    %51 = vector.broadcast %50 : vector<16x1xf32> to vector<16x512xf32>
    %52 = arith.subf %46, %51 : vector<16x512xf32>
    %53 = arith.mulf %52, %52 : vector<16x512xf32>
    %cst_22 = arith.constant dense<0.000000e+00> : vector<16xf32>
    %54 = vector.multi_reduction <add>, %53, %cst_22 [1] : vector<16x512xf32> to vector<16xf32>
    %55 = vector.shape_cast %54 : vector<16xf32> to vector<16x1xf32>
    %cst_23 = arith.constant 5.120000e+02 : f32
    %56 = vector.broadcast %cst_23 : f32 to vector<16x1xf32>
    %57 = arith.divf %55, %56 : vector<16x1xf32>
    %cst_24 = arith.constant 9.99999974E-6 : f32
    %58 = vector.broadcast %cst_24 : f32 to vector<16x1xf32>
    %59 = arith.addf %57, %58 : vector<16x1xf32>
    %60 = math.rsqrt %59 : vector<16x1xf32>
    %61 = vector.broadcast %60 : vector<16x1xf32> to vector<16x512xf32>
    %62 = arith.mulf %52, %61 : vector<16x512xf32>
    %c0_25 = arith.constant 0 : index
    %c0_26 = arith.constant 0 : index
    %63 = vector.load %arg7[%c0_25, %c0_26] : memref<1x512xf32, #tpu.memory_space<vmem>>, vector<1x512xf32>
    %64 = vector.broadcast %63 : vector<1x512xf32> to vector<16x512xf32>
    %65 = arith.mulf %62, %64 : vector<16x512xf32>
    %c0_27 = arith.constant 0 : index
    %c0_28 = arith.constant 0 : index
    %66 = vector.load %arg8[%c0_27, %c0_28] : memref<1x512xf32, #tpu.memory_space<vmem>>, vector<1x512xf32>
    %67 = vector.broadcast %66 : vector<1x512xf32> to vector<16x512xf32>
    %68 = arith.addf %65, %67 : vector<16x512xf32>
    %cst_29 = arith.constant 5.000000e-01 : f32
    %69 = vector.broadcast %cst_29 : f32 to vector<16x512xf32>
    %70 = arith.mulf %69, %68 : vector<16x512xf32>
    %71 = arith.mulf %68, %68 : vector<16x512xf32>
    %72 = arith.mulf %71, %68 : vector<16x512xf32>
    %cst_30 = arith.constant 4.471500e-02 : f32
    %73 = vector.broadcast %cst_30 : f32 to vector<16x512xf32>
    %74 = arith.mulf %73, %72 : vector<16x512xf32>
    %75 = arith.addf %68, %74 : vector<16x512xf32>
    %cst_31 = arith.constant 0.797884583 : f32
    %76 = vector.broadcast %cst_31 : f32 to vector<16x512xf32>
    %77 = arith.mulf %76, %75 : vector<16x512xf32>
    %78 = math.tanh %77 : vector<16x512xf32>
    %cst_32 = arith.constant 1.000000e+00 : f32
    %79 = vector.broadcast %cst_32 : f32 to vector<16x512xf32>
    %80 = arith.addf %79, %78 : vector<16x512xf32>
    %81 = arith.mulf %70, %80 : vector<16x512xf32>
    %82 = arith.truncf %81 : vector<16x512xf32> to vector<16x512xbf16>
    %c0_33 = arith.constant 0 : index
    %c0_34 = arith.constant 0 : index
    %83 = vector.load %arg9[%c0_33, %c0_34] : memref<512x128xbf16, #tpu.memory_space<vmem>>, vector<512x128xbf16>
    %cst_35 = arith.constant dense<0.000000e+00> : vector<16x128xf32>
    %84 = tpu.matmul %82, %83, %cst_35 {dimension_numbers = #tpu.dot_dimension_numbers<[1], [0], [0], [1], [0, 0, 1, 1], [], []>} : vector<16x512xbf16>, vector<512x128xbf16>, vector<16x128xf32> -> vector<16x128xf32>
    %c0_36 = arith.constant 0 : index
    %c0_37 = arith.constant 0 : index
    %85 = vector.load %arg10[%c0_36, %c0_37] : memref<1x128xf32, #tpu.memory_space<vmem>>, vector<1x128xf32>
    %86 = vector.broadcast %85 : vector<1x128xf32> to vector<16x128xf32>
    %87 = arith.addf %84, %86 : vector<16x128xf32>
    %88 = math.tanh %87 : vector<16x128xf32>
    %89 = arith.truncf %88 : vector<16x128xf32> to vector<16x128xbf16>
    %c0_38 = arith.constant 0 : index
    %c0_39 = arith.constant 0 : index
    %90 = vector.load %arg11[%c0_38, %c0_39] : memref<128x1xbf16, #tpu.memory_space<vmem>>, vector<128x1xbf16>
    %cst_40 = arith.constant dense<0.000000e+00> : vector<16x1xf32>
    %91 = tpu.matmul %89, %90, %cst_40 {dimension_numbers = #tpu.dot_dimension_numbers<[1], [0], [0], [1], [0, 0, 1, 1], [], []>} : vector<16x128xbf16>, vector<128x1xbf16>, vector<16x1xf32> -> vector<16x1xf32>
    %c0_41 = arith.constant 0 : index
    %c0_42 = arith.constant 0 : index
    %92 = vector.load %arg12[%c0_41, %c0_42] : memref<1x1xf32, #tpu.memory_space<vmem>>, vector<1x1xf32>
    %93 = vector.broadcast %92 : vector<1x1xf32> to vector<16x1xf32>
    %94 = arith.addf %91, %93 : vector<16x1xf32>
    %c16_i32 = arith.constant 16 : i32
    %95 = arith.muli %arg1, %c16_i32 : i32
    %96 = tpu.iota {dimensions = array<i32: 0>} : vector<16x1xi32>
    %97 = vector.broadcast %95 : i32 to vector<16x1xi32>
    %98 = arith.addi %97, %96 : vector<16x1xi32>
    %c24_i32 = arith.constant 24 : i32
    %99 = vector.broadcast %c24_i32 : i32 to vector<16x1xi32>
    %100 = arith.cmpi slt, %98, %99 : vector<16x1xi32>
    %cst_43 = arith.constant -1.000000e+30 : f32
    %101 = vector.broadcast %cst_43 : f32 to vector<16x1xf32>
    %102 = arith.select %100, %94, %101 : vector<16x1xi1>, vector<16x1xf32>
    %c0_44 = arith.constant 0 : index
    %c0_45 = arith.constant 0 : index
    %c0_46 = arith.constant 0 : index
    %103 = vector.load %arg14[%c0_44, %c0_45, %c0_46] : memref<1x1x1xf32, #tpu.memory_space<vmem>>, vector<1x1x1xf32>
    %104 = vector.shape_cast %103 : vector<1x1x1xf32> to vector<1x1xf32>
    %cst_47 = arith.constant dense<0xFF800000> : vector<1xf32>
    %105 = vector.multi_reduction <maximumf>, %102, %cst_47 [0] : vector<16x1xf32> to vector<1xf32>
    %106 = vector.shape_cast %105 : vector<1xf32> to vector<1x1xf32>
    %107 = arith.maximumf %104, %106 : vector<1x1xf32>
    %108 = arith.subf %104, %107 : vector<1x1xf32>
    %109 = math.exp %108 : vector<1x1xf32>
    %110 = vector.broadcast %107 : vector<1x1xf32> to vector<16x1xf32>
    %111 = arith.subf %102, %110 : vector<16x1xf32>
    %112 = math.exp %111 : vector<16x1xf32>
    %c0_48 = arith.constant 0 : index
    %c0_49 = arith.constant 0 : index
    %c0_50 = arith.constant 0 : index
    %113 = vector.load %arg15[%c0_48, %c0_49, %c0_50] : memref<1x1x1xf32, #tpu.memory_space<vmem>>, vector<1x1x1xf32>
    %114 = vector.shape_cast %113 : vector<1x1x1xf32> to vector<1x1xf32>
    %115 = arith.mulf %109, %114 : vector<1x1xf32>
    %cst_51 = arith.constant dense<0.000000e+00> : vector<1xf32>
    %116 = vector.multi_reduction <add>, %112, %cst_51 [0] : vector<16x1xf32> to vector<1xf32>
    %117 = vector.shape_cast %116 : vector<1xf32> to vector<1x1xf32>
    %118 = arith.addf %115, %117 : vector<1x1xf32>
    %c0_52 = arith.constant 0 : index
    %c0_53 = arith.constant 0 : index
    %c0_54 = arith.constant 0 : index
    %119 = vector.load %arg15[%c0_52, %c0_53, %c0_54] : memref<1x1x1xf32, #tpu.memory_space<vmem>>, vector<1x1x1xf32>
    %120 = vector.shape_cast %119 : vector<1x1x1xf32> to vector<1x1xf32>
    %121 = vector.shape_cast %118 : vector<1x1xf32> to vector<1x1x1xf32>
    tpu.vector_store %arg15[%c0_52, %c0_53, %c0_54], %121 {strides = array<i32>} : memref<1x1x1xf32, #tpu.memory_space<vmem>>, vector<1x1x1xf32>,
    %c0_55 = arith.constant 0 : index
    %c0_56 = arith.constant 0 : index
    %c0_57 = arith.constant 0 : index
    %122 = vector.load %arg16[%c0_55, %c0_56, %c0_57] : memref<1x1x512xf32, #tpu.memory_space<vmem>>, vector<1x1x512xf32>
    %123 = vector.shape_cast %122 : vector<1x1x512xf32> to vector<1x512xf32>
    %124 = vector.broadcast %109 : vector<1x1xf32> to vector<1x512xf32>
    %125 = arith.mulf %124, %123 : vector<1x512xf32>
    %126 = vector.shape_cast %112 : vector<16x1xf32> to vector<1x16xf32>
    %127 = arith.truncf %126 : vector<1x16xf32> to vector<1x16xbf16>
    %cst_58 = arith.constant dense<0.000000e+00> : vector<1x512xf32>
    %128 = tpu.matmul %127, %82, %cst_58 {dimension_numbers = #tpu.dot_dimension_numbers<[1], [0], [0], [1], [0, 0, 1, 1], [], []>} : vector<1x16xbf16>, vector<16x512xbf16>, vector<1x512xf32> -> vector<1x512xf32>
    %129 = arith.addf %125, %128 : vector<1x512xf32>
    %c0_59 = arith.constant 0 : index
    %c0_60 = arith.constant 0 : index
    %c0_61 = arith.constant 0 : index
    %130 = vector.load %arg16[%c0_59, %c0_60, %c0_61] : memref<1x1x512xf32, #tpu.memory_space<vmem>>, vector<1x1x512xf32>
    %131 = vector.shape_cast %130 : vector<1x1x512xf32> to vector<1x512xf32>
    %132 = vector.shape_cast %129 : vector<1x512xf32> to vector<1x1x512xf32>
    tpu.vector_store %arg16[%c0_59, %c0_60, %c0_61], %132 {strides = array<i32>} : memref<1x1x512xf32, #tpu.memory_space<vmem>>, vector<1x1x512xf32>,
    %c0_62 = arith.constant 0 : index
    %c0_63 = arith.constant 0 : index
    %c0_64 = arith.constant 0 : index
    %133 = vector.load %arg14[%c0_62, %c0_63, %c0_64] : memref<1x1x1xf32, #tpu.memory_space<vmem>>, vector<1x1x1xf32>
    %134 = vector.shape_cast %133 : vector<1x1x1xf32> to vector<1x1xf32>
    %135 = vector.shape_cast %107 : vector<1x1xf32> to vector<1x1x1xf32>
    tpu.vector_store %arg14[%c0_62, %c0_63, %c0_64], %135 {strides = array<i32>} : memref<1x1x1xf32, #tpu.memory_space<vmem>>, vector<1x1x1xf32>,
    %c1_i32 = arith.constant 1 : i32
    %136 = arith.cmpi eq, %arg1, %c1_i32 : i32
    %137 = arith.extui %136 : i1 to i32
    %c0_i32_65 = arith.constant 0 : i32
    %138 = arith.cmpi ne, %137, %c0_i32_65 : i32
    scf.if %138 {
      %c0_66 = arith.constant 0 : index
      %c0_67 = arith.constant 0 : index
      %c0_68 = arith.constant 0 : index
      %139 = vector.load %arg16[%c0_66, %c0_67, %c0_68] : memref<1x1x512xf32, #tpu.memory_space<vmem>>, vector<1x1x512xf32>
      %c0_69 = arith.constant 0 : index
      %c0_70 = arith.constant 0 : index
      %c0_71 = arith.constant 0 : index
      %140 = vector.load %arg15[%c0_69, %c0_70, %c0_71] : memref<1x1x1xf32, #tpu.memory_space<vmem>>, vector<1x1x1xf32>
      %cst_72 = arith.constant 1.000000e+00 : f32
      %141 = vector.broadcast %cst_72 : f32 to vector<1x1x1xf32>
      %142 = arith.divf %141, %140 : vector<1x1x1xf32>
      %143 = vector.broadcast %142 : vector<1x1x1xf32> to vector<1x1x512xf32>
      %144 = arith.mulf %139, %143 : vector<1x1x512xf32>
      %c0_73 = arith.constant 0 : index
      %c0_74 = arith.constant 0 : index
      %c0_75 = arith.constant 0 : index
      %145 = vector.load %arg13[%c0_73, %c0_74, %c0_75] : memref<1x1x512xf32, #tpu.memory_space<vmem>>, vector<1x1x512xf32>
      tpu.vector_store %arg13[%c0_73, %c0_74, %c0_75], %144 {strides = array<i32>} : memref<1x1x512xf32, #tpu.memory_space<vmem>>, vector<1x1x512xf32>,
    } else {
    }
    return
  }
  func.func @transform_0(%arg0: i32, %arg1: i32) -> (i32, i32, i32) {
    %c0_i32 = arith.constant 0 : i32
    %c0_i32_0 = arith.constant 0 : i32
    return %arg0, %arg1, %c0_i32 : i32, i32, i32
  }
  func.func @transform_1(%arg0: i32, %arg1: i32) -> (i32, i32) {
    %c0_i32 = arith.constant 0 : i32
    %c0_i32_0 = arith.constant 0 : i32
    %c0_i32_1 = arith.constant 0 : i32
    return %c0_i32, %c0_i32_0 : i32, i32
  }
  func.func @transform_2(%arg0: i32, %arg1: i32) -> (i32, i32) {
    %c0_i32 = arith.constant 0 : i32
    %c0_i32_0 = arith.constant 0 : i32
    %c0_i32_1 = arith.constant 0 : i32
    return %c0_i32, %c0_i32_0 : i32, i32
  }
  func.func @transform_3(%arg0: i32, %arg1: i32) -> (i32, i32) {
    %c0_i32 = arith.constant 0 : i32
    %c0_i32_0 = arith.constant 0 : i32
    %c0_i32_1 = arith.constant 0 : i32
    return %c0_i32, %c0_i32_0 : i32, i32
  }
  func.func @transform_4(%arg0: i32, %arg1: i32) -> (i32, i32) {
    %c0_i32 = arith.constant 0 : i32
    %c0_i32_0 = arith.constant 0 : i32
    %c0_i32_1 = arith.constant 0 : i32
    return %c0_i32, %c0_i32_0 : i32, i32
  }
  func.func @transform_5(%arg0: i32, %arg1: i32) -> (i32, i32) {
    %c0_i32 = arith.constant 0 : i32
    %c0_i32_0 = arith.constant 0 : i32
    %c0_i32_1 = arith.constant 0 : i32
    return %c0_i32, %c0_i32_0 : i32, i32
  }
  func.func @transform_6(%arg0: i32, %arg1: i32) -> (i32, i32) {
    %c0_i32 = arith.constant 0 : i32
    %c0_i32_0 = arith.constant 0 : i32
    %c0_i32_1 = arith.constant 0 : i32
    return %c0_i32, %c0_i32_0 : i32, i32
  }
  func.func @transform_7(%arg0: i32, %arg1: i32) -> (i32, i32) {
    %c0_i32 = arith.constant 0 : i32
    %c0_i32_0 = arith.constant 0 : i32
    %c0_i32_1 = arith.constant 0 : i32
    return %c0_i32, %c0_i32_0 : i32, i32
  }
  func.func @transform_8(%arg0: i32, %arg1: i32) -> (i32, i32) {
    %c0_i32 = arith.constant 0 : i32
    %c0_i32_0 = arith.constant 0 : i32
    %c0_i32_1 = arith.constant 0 : i32
    return %c0_i32, %c0_i32_0 : i32, i32
  }
  func.func @transform_9(%arg0: i32, %arg1: i32) -> (i32, i32) {
    %c0_i32 = arith.constant 0 : i32
    %c0_i32_0 = arith.constant 0 : i32
    %c0_i32_1 = arith.constant 0 : i32
    return %c0_i32, %c0_i32_0 : i32, i32
  }
  func.func @transform_10(%arg0: i32, %arg1: i32) -> (i32, i32) {
    %c0_i32 = arith.constant 0 : i32
    %c0_i32_0 = arith.constant 0 : i32
    %c0_i32_1 = arith.constant 0 : i32
    return %c0_i32, %c0_i32_0 : i32, i32
  }
  func.func @transform_11(%arg0: i32, %arg1: i32) -> (i32, i32, i32) {
    %c0_i32 = arith.constant 0 : i32
    %c0_i32_0 = arith.constant 0 : i32
    %c0_i32_1 = arith.constant 0 : i32
    return %arg0, %c0_i32, %c0_i32_0 : i32, i32, i32
  }
}

</mosaic_0001>

<llo_original>
// kernel: tpu_custom_call.1
$region0: #{tpu_custom_call.1}
  #allocation0 [shape = 'u32[]', space=smem, size = 0x4, offset = 0x4, fixed_abs, tag = 'smem constant byte address 0x4 - core index']
  #allocation1 [shape = 'u32[72,128]{1,0:T(1,128)}', space=vmem, size = 0x9000, scoped, tag = 'internal scratch']
  #allocation2 [shape = 'f32[1,1,1]{2,1,0:T(1,128)}', space=vmem, size = 0x200, scoped, tag = 'scratch operand']
  #allocation3 [shape = 'f32[1,1,1]{2,1,0:T(1,128)}', space=vmem, size = 0x200, scoped, tag = 'scratch operand']
  #allocation4 [shape = 'f32[1,1,512]{2,1,0:T(1,128)}', space=vmem, size = 0x800, scoped, tag = 'scratch operand']
  #allocation5 [shape = 'f32[1,1]{1,0:T(1,128)S(1)}', space=vmem, size = 0x200, scoped, tag = 'scoped memory for tpu_custom_call.1']
  %s0 = inlined_call_operand.hbm [shape: bf16[2,32,512], index: 0, kind: input, shape index: {}]
  %s1 = inlined_call_operand.vmem [shape: f32[1,512], index: 1, kind: input, shape index: {}]
  %s2 = inlined_call_operand.vmem [shape: f32[1,512], index: 2, kind: input, shape index: {}]
  %s3 = inlined_call_operand.hbm [shape: bf16[512,512], index: 3, kind: input, shape index: {}]
  %s4 = inlined_call_operand.vmem [shape: f32[1,512], index: 4, kind: input, shape index: {}]
  %s5 = inlined_call_operand.vmem [shape: f32[1,512], index: 5, kind: input, shape index: {}]
  %s6 = inlined_call_operand.vmem [shape: f32[1,512], index: 6, kind: input, shape index: {}]
  %s7 = inlined_call_operand.hbm [shape: bf16[512,128], index: 7, kind: input, shape index: {}]
  %s8 = inlined_call_operand.vmem [shape: f32[1,128], index: 8, kind: input, shape index: {}]
  %s9 = inlined_call_operand.vmem [shape: bf16[128,1], index: 9, kind: input, shape index: {}]
  %s10 = inlined_call_operand.<no memory space> [shape: f32[1,1], index: 10, kind: input, shape index: {}]
  %s11 = inlined_call_operand.hbm [shape: f32[2,1,512], index: 11, kind: output, shape index: {}]
  %s12 = sld [smem:[#allocation0]]
  $region97: #{tpu_custom_call.1} parent=0
    _
  %s14 = ssub.s32 1, %s12
  %s15 = scalar_select 0, %s14, %s12
  %v16 = vstv %s10
  %17 = vst [vmem:[#allocation5] sm:$0x1] %v16
  $region1: #{tpu_custom_call.1} parent=0
    #allocation6 [shape = 'u8[32768]{0}', space=vmem, size = 0x8000, scoped, tag = 'input window, operand 0']
    #allocation7 [shape = 's32[2]{0}', space=sflag, size = 0x8, scoped, tag = 'scoped memory for tpu_custom_call.1']
    #allocation8 [shape = 's32[2]{0}', space=sflag, size = 0x8, scoped, tag = 'scoped memory for tpu_custom_call.1']
    #allocation9 [shape = 'u8[524288]{0}', space=vmem, size = 0x80000, scoped, tag = 'input window, operand 3, single buffered']
    #allocation10 [shape = 's32[1]{0}', space=sflag, size = 0x4, scoped, tag = 'scoped memory for tpu_custom_call.1']
    #allocation11 [shape = 'u8[131072]{0}', space=vmem, size = 0x20000, scoped, tag = 'input window, operand 7, single buffered']
    #allocation12 [shape = 'u8[4096]{0}', space=vmem, size = 0x1000, scoped, tag = 'output window, operand 0']
    %18 = vsyncpa [#allocation7], 0
    %s19 = scalar_lea.sflag [#allocation7], 1
    %20 = vsyncpa %s19, 0
    %21 = vsyncpa [#allocation10], 0
    %22 = vsyncpa [#allocation8], 0
    %s23 = scalar_lea.sflag [#allocation8], 1
    %24 = vsyncpa %s23, 0
    loop: start=0, step=1, limit=6
    $region2: #{tpu_custom_call.1} parent=1 // loop_pre_header
      _
    $region3: #{tpu_custom_call.1} parent=1 // loop_header
      %s26 = sphi 0, %s30
      %p27 = scmp.ge.s32.totalorder %s26, 6
      %s33 = sphi 0, %s45
      %s34 = sphi 0, %s41
      %s35 = sphi 0, %s33
      %s36 = sphi 0, %s34
      %s37 = sphi 0, %s35
      %s38 = sphi 0, %s36
      %s50 = sphi 0, %s52
      %s53 = sphi 0, %s50
      %s54 = sphi 0, %s53
      %s70 = sphi 0, %s54
      %s74 = sphi 0, %s74
      %s76 = sphi 0, %s74
      %s77 = sphi 0, %s76
      %s91 = sphi 0, %s77
      %s95 = sphi 0, %s95
      %s97 = sphi 0, %s95
      %s98 = sphi 0, %s97
      %s112 = sphi 0, %s98
      %s116 = sphi 0, %s116
      %s118 = sphi 0, %s116
      %s119 = sphi 0, %s118
      %s133 = sphi 0, %s119
      %s137 = sphi 0, %s137
      %s139 = sphi 0, %s137
      %s140 = sphi 0, %s139
      %s154 = sphi 0, %s140
      %s158 = sphi 0, %s158
      %s160 = sphi 0, %s158
      %s161 = sphi 0, %s160
      %s175 = sphi 0, %s161
      %s179 = sphi 0, %s179
      %s181 = sphi 0, %s179
      %s182 = sphi 0, %s181
      %s196 = sphi 0, %s182
      %s200 = sphi 0, %s200
      %s202 = sphi 0, %s200
      %s203 = sphi 0, %s202
      %s217 = sphi 0, %s203
      %s221 = sphi 0, %s221
      %s223 = sphi 0, %s221
      %s224 = sphi 0, %s223
      %s238 = sphi 0, %s224
      %s242 = sphi 0, %s242
      %s244 = sphi 0, %s242
      %s245 = sphi 0, %s244
      %s259 = sphi 0, %s245
      %s263 = sphi 0, %s263
      %s265 = sphi 0, %s263
      %s266 = sphi 0, %s265
      %s280 = sphi 0, %s266
      %s286 = sphi 0, %s288
      %s289 = sphi 0, %s286
      %s290 = sphi 0, %s289
      %s306 = sphi 0, %s290
    $region4: #{tpu_custom_call.1} parent=1 // loop_header_branch
      %29 = sbr.rel (%p27) target = $region8
    $region5: #{tpu_custom_call.1} parent=1 // loop_body
      %s31 = ssub.s32 %s26, 1
      %s32 = ssub.s32 %s26, 2
      %s39 = sadd.s32 1, %s34
      %p40 = scmp.ge.s32.totalorder %s39, 2
      %s41 = scalar_select %p40, 0, %s39
      %s42 = sadd.s32 1, %s33
      %s43 = scalar_select %p40, %s42, %s33
      %p44 = scmp.ge.s32.totalorder %s43, 2
      %s45 = scalar_select %p44, 0, %s43
      %s46 = ssub.s32 %s33, %s45
      %s47 = ssub.s32 %s34, %s41
      %s48 = sor.u32 %s46, %s47
      %p49 = scmp.eq.s32.totalorder %s48, 0
      %s51 = sadd.s32 %s50, 1
      %s52 = scalar_select %p49, %s50, %s51
      %p55 = pneg %p49
      %p56 = scmp.eq.s32.totalorder %s26, 3
      %p57 = por %p55, %p56
      %p58 = scmp.ne.s32.totalorder %s50, %s53
      %p59 = scmp.eq.s32.totalorder %s26, 0
      %p60 = por %p58, %p59
      %p61 = scmp.ne.s32.totalorder %s50, %s53
      %p62 = scmp.eq.s32.totalorder %s31, 3
      %p63 = por %p61, %p62
      %p64 = scmp.ne.s32.totalorder %s53, %s54
      %p65 = scmp.eq.s32.totalorder %s31, 0
      %p66 = por %p64, %p65
      %p67 = scmp.ne.s32.totalorder %s53, %s54
      %p68 = scmp.eq.s32.totalorder %s32, 3
      %p69 = por %p67, %p68
      %p71 = scmp.ne.s32.totalorder %s54, %s70
      %p72 = scmp.eq.s32.totalorder %s32, 0
      %p73 = por %p71, %p72
      %s75 = sadd.s32 %s74, 1
      %p78 = scmp.eq.s32.totalorder %s26, 3
      %p79 = scmp.ne.s32.totalorder %s74, %s76
      %p80 = scmp.eq.s32.totalorder %s26, 0
      %p81 = por %p79, %p80
      %p82 = scmp.ne.s32.totalorder %s74, %s76
      %p83 = scmp.eq.s32.totalorder %s31, 3
      %p84 = por %p82, %p83
      %p85 = scmp.ne.s32.totalorder %s76, %s77
      %p86 = scmp.eq.s32.totalorder %s31, 0
      %p87 = por %p85, %p86
      %p88 = scmp.ne.s32.totalorder %s76, %s77
      %p89 = scmp.eq.s32.totalorder %s32, 3
      %p90 = por %p88, %p89
      %p92 = scmp.ne.s32.totalorder %s77, %s91
      %p93 = scmp.eq.s32.totalorder %s32, 0
      %p94 = por %p92, %p93
      %s96 = sadd.s32 %s95, 1
      %p99 = scmp.eq.s32.totalorder %s26, 3
      %p100 = scmp.ne.s32.totalorder %s95, %s97
      %p101 = scmp.eq.s32.totalorder %s26, 0
      %p102 = por %p100, %p101
      %p103 = scmp.ne.s32.totalorder %s95, %s97
      %p104 = scmp.eq.s32.totalorder %s31, 3
      %p105 = por %p103, %p104
      %p106 = scmp.ne.s32.totalorder %s97, %s98
      %p107 = scmp.eq.s32.totalorder %s31, 0
      %p108 = por %p106, %p107
      %p109 = scmp.ne.s32.totalorder %s97, %s98
      %p110 = scmp.eq.s32.totalorder %s32, 3
      %p111 = por %p109, %p110
      %p113 = scmp.ne.s32.totalorder %s98, %s112
      %p114 = scmp.eq.s32.totalorder %s32, 0
      %p115 = por %p113, %p114
      %s117 = sadd.s32 %s116, 1
      %p120 = scmp.eq.s32.totalorder %s26, 3
      %p121 = scmp.ne.s32.totalorder %s116, %s118
      %p122 = scmp.eq.s32.totalorder %s26, 0
      %p123 = por %p121, %p122
      %p124 = scmp.ne.s32.totalorder %s116, %s118
      %p125 = scmp.eq.s32.totalorder %s31, 3
      %p126 = por %p124, %p125
      %p127 = scmp.ne.s32.totalorder %s118, %s119
      %p128 = scmp.eq.s32.totalorder %s31, 0
      %p129 = por %p127, %p128
      %p130 = scmp.ne.s32.totalorder %s118, %s119
      %p131 = scmp.eq.s32.totalorder %s32, 3
      %p132 = por %p130, %p131
      %p134 = scmp.ne.s32.totalorder %s119, %s133
      %p135 = scmp.eq.s32.totalorder %s32, 0
      %p136 = por %p134, %p135
      %s138 = sadd.s32 %s137, 1
      %p141 = scmp.eq.s32.totalorder %s26, 3
      %p142 = scmp.ne.s32.totalorder %s137, %s139
      %p143 = scmp.eq.s32.totalorder %s26, 0
      %p144 = por %p142, %p143
      %p145 = scmp.ne.s32.totalorder %s137, %s139
      %p146 = scmp.eq.s32.totalorder %s31, 3
      %p147 = por %p145, %p146
      %p148 = scmp.ne.s32.totalorder %s139, %s140
      %p149 = scmp.eq.s32.totalorder %s31, 0
      %p150 = por %p148, %p149
      %p151 = scmp.ne.s32.totalorder %s139, %s140
      %p152 = scmp.eq.s32.totalorder %s32, 3
      %p153 = por %p151, %p152
      %p155 = scmp.ne.s32.totalorder %s140, %s154
      %p156 = scmp.eq.s32.totalorder %s32, 0
      %p157 = por %p155, %p156
      %s159 = sadd.s32 %s158, 1
      %p162 = scmp.eq.s32.totalorder %s26, 3
      %p163 = scmp.ne.s32.totalorder %s158, %s160
      %p164 = scmp.eq.s32.totalorder %s26, 0
      %p165 = por %p163, %p164
      %p166 = scmp.ne.s32.totalorder %s158, %s160
      %p167 = scmp.eq.s32.totalorder %s31, 3
      %p168 = por %p166, %p167
      %p169 = scmp.ne.s32.totalorder %s160, %s161
      %p170 = scmp.eq.s32.totalorder %s31, 0
      %p171 = por %p169, %p170
      %p172 = scmp.ne.s32.totalorder %s160, %s161
      %p173 = scmp.eq.s32.totalorder %s32, 3
      %p174 = por %p172, %p173
      %p176 = scmp.ne.s32.totalorder %s161, %s175
      %p177 = scmp.eq.s32.totalorder %s32, 0
      %p178 = por %p176, %p177
      %s180 = sadd.s32 %s179, 1
      %p183 = scmp.eq.s32.totalorder %s26, 3
      %p184 = scmp.ne.s32.totalorder %s179, %s181
      %p185 = scmp.eq.s32.totalorder %s26, 0
      %p186 = por %p184, %p185
      %p187 = scmp.ne.s32.totalorder %s179, %s181
      %p188 = scmp.eq.s32.totalorder %s31, 3
      %p189 = por %p187, %p188
      %p190 = scmp.ne.s32.totalorder %s181, %s182
      %p191 = scmp.eq.s32.totalorder %s31, 0
      %p192 = por %p190, %p191
      %p193 = scmp.ne.s32.totalorder %s181, %s182
      %p194 = scmp.eq.s32.totalorder %s32, 3
      %p195 = por %p193, %p194
      %p197 = scmp.ne.s32.totalorder %s182, %s196
      %p198 = scmp.eq.s32.totalorder %s32, 0
      %p199 = por %p197, %p198
      %s201 = sadd.s32 %s200, 1
      %p204 = scmp.eq.s32.totalorder %s26, 3
      %p205 = scmp.ne.s32.totalorder %s200, %s202
      %p206 = scmp.eq.s32.totalorder %s26, 0
      %p207 = por %p205, %p206
      %p208 = scmp.ne.s32.totalorder %s200, %s202
      %p209 = scmp.eq.s32.totalorder %s31, 3
      %p210 = por %p208, %p209
      %p211 = scmp.ne.s32.totalorder %s202, %s203
      %p212 = scmp.eq.s32.totalorder %s31, 0
      %p213 = por %p211, %p212
      %p214 = scmp.ne.s32.totalorder %s202, %s203
      %p215 = scmp.eq.s32.totalorder %s32, 3
      %p216 = por %p214, %p215
      %p218 = scmp.ne.s32.totalorder %s203, %s217
      %p219 = scmp.eq.s32.totalorder %s32, 0
      %p220 = por %p218, %p219
      %s222 = sadd.s32 %s221, 1
      %p225 = scmp.eq.s32.totalorder %s26, 3
      %p226 = scmp.ne.s32.totalorder %s221, %s223
      %p227 = scmp.eq.s32.totalorder %s26, 0
      %p228 = por %p226, %p227
      %p229 = scmp.ne.s32.totalorder %s221, %s223
      %p230 = scmp.eq.s32.totalorder %s31, 3
      %p231 = por %p229, %p230
      %p232 = scmp.ne.s32.totalorder %s223, %s224
      %p233 = scmp.eq.s32.totalorder %s31, 0
      %p234 = por %p232, %p233
      %p235 = scmp.ne.s32.totalorder %s223, %s224
      %p236 = scmp.eq.s32.totalorder %s32, 3
      %p237 = por %p235, %p236
      %p239 = scmp.ne.s32.totalorder %s224, %s238
      %p240 = scmp.eq.s32.totalorder %s32, 0
      %p241 = por %p239, %p240
      %s243 = sadd.s32 %s242, 1
      %p246 = scmp.eq.s32.totalorder %s26, 3
      %p247 = scmp.ne.s32.totalorder %s242, %s244
      %p248 = scmp.eq.s32.totalorder %s26, 0
      %p249 = por %p247, %p248
      %p250 = scmp.ne.s32.totalorder %s242, %s244
      %p251 = scmp.eq.s32.totalorder %s31, 3
      %p252 = por %p250, %p251
      %p253 = scmp.ne.s32.totalorder %s244, %s245
      %p254 = scmp.eq.s32.totalorder %s31, 0
      %p255 = por %p253, %p254
      %p256 = scmp.ne.s32.totalorder %s244, %s245
      %p257 = scmp.eq.s32.totalorder %s32, 3
      %p258 = por %p256, %p257
      %p260 = scmp.ne.s32.totalorder %s245, %s259
      %p261 = scmp.eq.s32.totalorder %s32, 0
      %p262 = por %p260, %p261
      %s264 = sadd.s32 %s263, 1
      %p267 = scmp.eq.s32.totalorder %s26, 3
      %p268 = scmp.ne.s32.totalorder %s263, %s265
      %p269 = scmp.eq.s32.totalorder %s26, 0
      %p270 = por %p268, %p269
      %p271 = scmp.ne.s32.totalorder %s263, %s265
      %p272 = scmp.eq.s32.totalorder %s31, 3
      %p273 = por %p271, %p272
      %p274 = scmp.ne.s32.totalorder %s265, %s266
      %p275 = scmp.eq.s32.totalorder %s31, 0
      %p276 = por %p274, %p275
      %p277 = scmp.ne.s32.totalorder %s265, %s266
      %p278 = scmp.eq.s32.totalorder %s32, 3
      %p279 = por %p277, %p278
      %p281 = scmp.ne.s32.totalorder %s266, %s280
      %p282 = scmp.eq.s32.totalorder %s32, 0
      %p283 = por %p281, %p282
      %s284 = ssub.s32 %s33, %s45
      %p285 = scmp.eq.s32.totalorder %s284, 0
      %s287 = sadd.s32 %s286, 1
      %s288 = scalar_select %p285, %s286, %s287
      %p291 = pneg %p285
      %p292 = scmp.eq.s32.totalorder %s26, 3
      %p293 = por %p291, %p292
      %p294 = scmp.ne.s32.totalorder %s286, %s289
      %p295 = scmp.eq.s32.totalorder %s26, 0
      %p296 = por %p294, %p295
      %p297 = scmp.ne.s32.totalorder %s286, %s289
      %p298 = scmp.eq.s32.totalorder %s31, 3
      %p299 = por %p297, %p298
      %p300 = scmp.ne.s32.totalorder %s289, %s290
      %p301 = scmp.eq.s32.totalorder %s31, 0
      %p302 = por %p300, %p301
      %p303 = scmp.ne.s32.totalorder %s289, %s290
      %p304 = scmp.eq.s32.totalorder %s32, 3
      %p305 = por %p303, %p304
      %p307 = scmp.ne.s32.totalorder %s290, %s306
      %p308 = scmp.eq.s32.totalorder %s32, 0
      %p309 = por %p307, %p308
      %p310 = scmp.le.s32.totalorder 1, %s26
      %p311 = scmp.lt.s32.totalorder %s26, 5
      %p312 = pnand %p310, %p311
      %p313 = pneg %p312
      // Predicated region
      $region9: #{tpu_custom_call.1} parent=5 // pred_check
        _
      $region10: #{tpu_custom_call.1} parent=5 // pred_check_branch
        %315 = sbr.rel (%p312) target = $region12
      $region11: #{tpu_custom_call.1} parent=5 // pred_region
        %s316 = ssub.s32 %s26, 1
        // Predicated region
        $region13: #{tpu_custom_call.1} parent=11 // pred_check
          %p317 = pneg %p87
        $region14: #{tpu_custom_call.1} parent=11 // pred_check_branch
          %319 = sbr.rel (%p317) target = $region16
        $region15: #{tpu_custom_call.1} parent=11 // pred_region
          _
        $region16: #{tpu_custom_call.1} parent=11 // pred_fallthru
          _
        // Predicated region
        $region17: #{tpu_custom_call.1} parent=11 // pred_check
          %p320 = pneg %p108
        $region18: #{tpu_custom_call.1} parent=11 // pred_check_branch
          %322 = sbr.rel (%p320) target = $region20
        $region19: #{tpu_custom_call.1} parent=11 // pred_region
          _
        $region20: #{tpu_custom_call.1} parent=11 // pred_fallthru
          _
        // Predicated region
        $region21: #{tpu_custom_call.1} parent=11 // pred_check
          %p323 = pneg %p129
        $region22: #{tpu_custom_call.1} parent=11 // pred_check_branch
          %325 = sbr.rel (%p323) target = $region24
        $region23: #{tpu_custom_call.1} parent=11 // pred_region
          %327 = vsyncadd [#allocation10], 0
          %s328 = sshll.u32 %s3, 4
          %s329 = int_to_ptr.hbm [resolvable:$true] %s328
          %s330 = sshll.u32 [#allocation9], 4
          %s331 = int_to_ptr.vmem [resolvable:$true] %s330
          %336 = dma.hbm_to_vmem [thread:$0]  %s329, 16384, %s331, [#allocation10], 256, 256, 16
        $region24: #{tpu_custom_call.1} parent=11 // pred_fallthru
          _
        // Predicated region
        $region25: #{tpu_custom_call.1} parent=11 // pred_check
          %p337 = pneg %p150
        $region26: #{tpu_custom_call.1} parent=11 // pred_check_branch
          %339 = sbr.rel (%p337) target = $region28
        $region27: #{tpu_custom_call.1} parent=11 // pred_region
          _
        $region28: #{tpu_custom_call.1} parent=11 // pred_fallthru
          _
        // Predicated region
        $region29: #{tpu_custom_call.1} parent=11 // pred_check
          %p340 = pneg %p171
        $region30: #{tpu_custom_call.1} parent=11 // pred_check_branch
          %342 = sbr.rel (%p340) target = $region32
        $region31: #{tpu_custom_call.1} parent=11 // pred_region
          _
        $region32: #{tpu_custom_call.1} parent=11 // pred_fallthru
          _
        // Predicated region
        $region33: #{tpu_custom_call.1} parent=11 // pred_check
          %p343 = pneg %p192
        $region34: #{tpu_custom_call.1} parent=11 // pred_check_branch
          %345 = sbr.rel (%p343) target = $region36
        $region35: #{tpu_custom_call.1} parent=11 // pred_region
          _
        $region36: #{tpu_custom_call.1} parent=11 // pred_fallthru
          _
        // Predicated region
        $region37: #{tpu_custom_call.1} parent=11 // pred_check
          %p346 = pneg %p213
        $region38: #{tpu_custom_call.1} parent=11 // pred_check_branch
          %348 = sbr.rel (%p346) target = $region40
        $region39: #{tpu_custom_call.1} parent=11 // pred_region
          %350 = vsyncadd [#allocation10], 0
          %s351 = sshll.u32 %s7, 4
          %s352 = int_to_ptr.hbm [resolvable:$true] %s351
          %s353 = sshll.u32 [#allocation11], 4
          %s354 = int_to_ptr.vmem [resolvable:$true] %s353
          %359 = dma.hbm_to_vmem [thread:$0]  %s352, 4096, %s354, [#allocation10], 64, 64, 4
        $region40: #{tpu_custom_call.1} parent=11 // pred_fallthru
          _
        // Predicated region
        $region41: #{tpu_custom_call.1} parent=11 // pred_check
          %p360 = pneg %p234
        $region42: #{tpu_custom_call.1} parent=11 // pred_check_branch
          %362 = sbr.rel (%p360) target = $region44
        $region43: #{tpu_custom_call.1} parent=11 // pred_region
          _
        $region44: #{tpu_custom_call.1} parent=11 // pred_fallthru
          _
        // Predicated region
        $region45: #{tpu_custom_call.1} parent=11 // pred_check
          %p363 = pneg %p255
        $region46: #{tpu_custom_call.1} parent=11 // pred_check_branch
          %365 = sbr.rel (%p363) target = $region48
        $region47: #{tpu_custom_call.1} parent=11 // pred_region
          _
        $region48: #{tpu_custom_call.1} parent=11 // pred_fallthru
          _
        // Predicated region
        $region49: #{tpu_custom_call.1} parent=11 // pred_check
          %p366 = pneg %p276
        $region50: #{tpu_custom_call.1} parent=11 // pred_check_branch
          %368 = sbr.rel (%p366) target = $region52
        $region51: #{tpu_custom_call.1} parent=11 // pred_region
          _
        $region52: #{tpu_custom_call.1} parent=11 // pred_fallthru
          _
      $region12: #{tpu_custom_call.1} parent=5 // pred_fallthru
        _
      %p369 = scmp.lt.s32.totalorder %s26, 4
      // Predicated region
      $region53: #{tpu_custom_call.1} parent=5 // pred_check
        %p370 = pneg %p369
      $region54: #{tpu_custom_call.1} parent=5 // pred_check_branch
        %372 = sbr.rel (%p370) target = $region56
      $region55: #{tpu_custom_call.1} parent=5 // pred_region
        // Predicated region
        $region57: #{tpu_custom_call.1} parent=55 // pred_check
          %p373 = pneg %p60
        $region58: #{tpu_custom_call.1} parent=55 // pred_check_branch
          %375 = sbr.rel (%p373) target = $region60
        $region59: #{tpu_custom_call.1} parent=55 // pred_region
          %s376 = sand.u32 %s50, 1
          %s377 = scalar_lea.sflag [#allocation7], %s376
          %s378 = sand.u32 %s50, 1
          %s379 = smul.addr %s378, 32
          %s380 = scalar_lea.vmem [#allocation6], %s379
          %s381 = smul.u32 2, %s34
          %383 = vsyncadd %s377, 0
          %s384 = smul.addr %s381, 4
          %s385 = smul.addr %s33, 16
          %s386 = sadd.s32 %s384, %s385
          %s387 = smul.addr %s386, 4
          %s388 = scalar_lea.hbm %s0, %s387
          %s389 = sshll.u32 %s388, 4
          %s390 = int_to_ptr.hbm [resolvable:$true] %s389
          %s391 = sshll.u32 %s380, 4
          %s392 = int_to_ptr.vmem [resolvable:$true] %s391
          %397 = dma.hbm_to_vmem [thread:$0]  %s390, 512, %s392, %s377, 256, 256, 16
        $region60: #{tpu_custom_call.1} parent=55 // pred_fallthru
          _
      $region56: #{tpu_custom_call.1} parent=5 // pred_fallthru
        _
      %p398 = scmp.le.s32.totalorder 1, %s26
      %p399 = scmp.lt.s32.totalorder %s26, 5
      %p400 = pnand %p398, %p399
      %p401 = pneg %p400
      // Predicated region
      $region61: #{tpu_custom_call.1} parent=5 // pred_check
        _
      $region62: #{tpu_custom_call.1} parent=5 // pred_check_branch
        %403 = sbr.rel (%p400) target = $region64
      $region63: #{tpu_custom_call.1} parent=5 // pred_region
        %s404 = ssub.s32 %s26, 1
        %s405 = sand.u32 %s53, 1
        %s406 = scalar_lea.sflag [#allocation7], %s405
        %s407 = sand.u32 %s53, 1
        %s408 = smul.addr %s407, 32
        %s409 = scalar_lea.vmem [#allocation6], %s408
        // Predicated region
        $region65: #{tpu_custom_call.1} parent=63 // pred_check
          %p410 = pneg %p66
        $region66: #{tpu_custom_call.1} parent=63 // pred_check_branch
          %412 = sbr.rel (%p410) target = $region68
        $region67: #{tpu_custom_call.1} parent=63 // pred_region
          %414 = dma.done %s406, 512
        $region68: #{tpu_custom_call.1} parent=63 // pred_fallthru
          _
        // Predicated region
        $region69: #{tpu_custom_call.1} parent=63 // pred_check
          %p415 = pneg %p129
        $region70: #{tpu_custom_call.1} parent=63 // pred_check_branch
          %417 = sbr.rel (%p415) target = $region72
        $region71: #{tpu_custom_call.1} parent=63 // pred_region
          %419 = dma.done [#allocation10], 16384
        $region72: #{tpu_custom_call.1} parent=63 // pred_fallthru
          _
        // Predicated region
        $region73: #{tpu_custom_call.1} parent=63 // pred_check
          %p420 = pneg %p213
        $region74: #{tpu_custom_call.1} parent=63 // pred_check_branch
          %422 = sbr.rel (%p420) target = $region76
        $region75: #{tpu_custom_call.1} parent=63 // pred_region
          %424 = dma.done [#allocation10], 4096
        $region76: #{tpu_custom_call.1} parent=63 // pred_fallthru
          _
        %s425 = sand.u32 %s53, 1
        %s426 = scalar_lea.sflag [#allocation7], %s425
        %s427 = sand.u32 %s53, 1
        %s428 = smul.addr %s427, 32
        %s429 = scalar_lea.vmem [#allocation6], %s428
        %p430 = pneg %p66
        %p431 = pneg %p63
        %p432 = pneg %p87
        %p433 = pneg %p84
        %p434 = pneg %p108
        %p435 = pneg %p105
        %p436 = pneg %p129
        %p437 = pneg %p126
        %p438 = pneg %p150
        %p439 = pneg %p147
        %p440 = pneg %p171
        %p441 = pneg %p168
        %p442 = pneg %p192
        %p443 = pneg %p189
        %p444 = pneg %p213
        %p445 = pneg %p210
        %p446 = pneg %p234
        %p447 = pneg %p231
        %p448 = pneg %p255
        %p449 = pneg %p252
        %p450 = pneg %p276
        %p451 = pneg %p273
        %p452 = pneg %p302
        %p453 = pneg %p299
        %s454 = sand.u32 %s289, 1
        %s455 = scalar_lea.sflag [#allocation8], %s454
        %s456 = sand.u32 %s289, 1
        %s457 = smul.addr %s456, 4
        %s458 = scalar_lea.vmem [#allocation12], %s457
        %s459 = smul.u32 2, %s36
        %p461 = scmp.eq.s32.totalorder %s36, 0
        // Predicated region
        $region77: #{tpu_custom_call.1} parent=63 // pred_check
          %p462 = pneg %p461
        $region78: #{tpu_custom_call.1} parent=63 // pred_check_branch
          %464 = sbr.rel (%p462) target = $region80
        $region79: #{tpu_custom_call.1} parent=63 // pred_region
          %vm465 = vcmask 0
          %466 = vst.msk [vmem:[#allocation2] sm:$0x1] %vm465, -1e+30
          %467 = vst.msk [vmem:[#allocation3] sm:$0x1] %vm465, 0.0
          %v468 = vlaneseq
          %vm469 = vcmp.ge.s32.totalorder %v468, 0
          %vm470 = vcmp.lt.s32.totalorder %v468, 512
          %vm471 = vmand %vm469, %vm470
          %472 = vst.msk [vmem:[#allocation4] sm:$0xf] %vm471, 0.0
        $region80: #{tpu_custom_call.1} parent=63 // pred_fallthru
          _
        %v473 = vld [vmem:[%s409] sm:$0xff]
        %v474 = vld [vmem:[%s409 + $0x8] sm:$0xff]
        %v475 = vld [vmem:[%s409 + $0x10] sm:$0xff]
        %v476 = vld [vmem:[%s409 + $0x18] sm:$0xff]
        %v477 = vunpack.c.l.bf16 %v473
        %v478 = vunpack.c.h.bf16 %v473
        %v479 = vunpack.c.l.bf16 %v474
        %v480 = vunpack.c.h.bf16 %v474
        %v481 = vunpack.c.l.bf16 %v475
        %v482 = vunpack.c.h.bf16 %v475
        %v483 = vunpack.c.l.bf16 %v476
        %v484 = vunpack.c.h.bf16 %v476
        %v485 = vadd.f32 %v477, %v478
        %v486 = vadd.f32 %v485, %v479
        %v487 = vadd.f32 %v486, %v480
        %488 = vadd.xlane.f32.xlu0 %v487
        %v489 = vpop.xlane.xlu0 %488
        %v490 = vadd.f32 %v481, %v482
        %v491 = vadd.f32 %v490, %v483
        %v492 = vadd.f32 %v491, %v484
        %493 = vadd.xlane.f32.xlu0 %v492
        %v494 = vpop.xlane.xlu0 %493
        %v495 = vrcp.pop 512.0
        %v496 = vmul.f32 512.0, %v495
        %v497 = vsub.f32 1.0, %v496
        %v498 = vmul.f32 %v495, %v497
        %v499 = vadd.f32 %v495, %v498
        %vm500 = vweird.f32 %v495
        %v501 = vsel %vm500, %v495, %v499
        %v502 = vmul.f32 %v489, %v501
        %v503 = vmul.f32 %v494, %v501
        %v504 = vsub.f32 %v477, %v502
        %v505 = vsub.f32 %v478, %v502
        %v506 = vsub.f32 %v479, %v502
        %v507 = vsub.f32 %v480, %v502
        %v508 = vsub.f32 %v481, %v503
        %v509 = vsub.f32 %v482, %v503
        %v510 = vsub.f32 %v483, %v503
        %v511 = vsub.f32 %v484, %v503
        %v512 = vmul.f32 %v504, %v504
        %v513 = vmul.f32 %v505, %v505
        %v514 = vmul.f32 %v506, %v506
        %v515 = vmul.f32 %v507, %v507
        %v516 = vmul.f32 %v508, %v508
        %v517 = vmul.f32 %v509, %v509
        %v518 = vmul.f32 %v510, %v510
        %v519 = vmul.f32 %v511, %v511
        %v520 = vadd.f32 %v512, %v513
        %v521 = vadd.f32 %v520, %v514
        %v522 = vadd.f32 %v521, %v515
        %523 = vadd.xlane.f32.xlu0 %v522
        %v524 = vpop.xlane.xlu0 %523
        %v525 = vadd.f32 %v516, %v517
        %v526 = vadd.f32 %v525, %v518
        %v527 = vadd.f32 %v526, %v519
        %528 = vadd.xlane.f32.xlu0 %v527
        %v529 = vpop.xlane.xlu0 %528
        %v530 = vmul.f32 %v524, %v501
        %v531 = vmul.f32 %v529, %v501
        %v532 = vadd.f32 %v530, 1e-05
        %v533 = vadd.f32 %v531, 1e-05
        %v534 = vrsqrt.pop %v532
        %v535 = vmul.f32 %v534, %v532
        %v536 = vmul.f32 %v535, %v534
        %v537 = vmul.f32 0.5, %v536
        %v538 = vsub.f32 1.5, %v537
        %v539 = vmul.f32 %v534, %v538
        %vm540 = vweird.f32 %v532
        %vm541 = vweird.f32 %v534
        %vm542 = vmor %vm540, %vm541
        %v543 = vsel %vm542, %v534, %v539
        %v544 = vrsqrt.pop %v533
        %v545 = vmul.f32 %v544, %v533
        %v546 = vmul.f32 %v545, %v544
        %v547 = vmul.f32 0.5, %v546
        %v548 = vsub.f32 1.5, %v547
        %v549 = vmul.f32 %v544, %v548
        %vm550 = vweird.f32 %v533
        %vm551 = vweird.f32 %v544
        %vm552 = vmor %vm550, %vm551
        %v553 = vsel %vm552, %v544, %v549
        %v554 = vmul.f32 %v504, %v543
        %v555 = vmul.f32 %v505, %v543
        %v556 = vmul.f32 %v506, %v543
        %v557 = vmul.f32 %v507, %v543
        %v558 = vmul.f32 %v508, %v553
        %v559 = vmul.f32 %v509, %v553
        %v560 = vmul.f32 %v510, %v553
        %v561 = vmul.f32 %v511, %v553
        %v562 = vld [vmem:[%s1] sm:$0xf]
        %v564 = vperm.slane %v562, 0
        %v565 = vperm.slane %v562, 1
        %v566 = vperm.slane %v562, 2
        %v567 = vperm.slane %v562, 3
        %v572 = vmul.f32 %v554, %v564
        %v573 = vmul.f32 %v555, %v565
        %v574 = vmul.f32 %v556, %v566
        %v575 = vmul.f32 %v557, %v567
        %v576 = vmul.f32 %v558, %v564
        %v577 = vmul.f32 %v559, %v565
        %v578 = vmul.f32 %v560, %v566
        %v579 = vmul.f32 %v561, %v567
        %v580 = vld [vmem:[%s2] sm:$0xf]
        %v582 = vperm.slane %v580, 0
        %v583 = vperm.slane %v580, 1
        %v584 = vperm.slane %v580, 2
        %v585 = vperm.slane %v580, 3
        %v590 = vadd.f32 %v572, %v582
        %v591 = vadd.f32 %v573, %v583
        %v592 = vadd.f32 %v574, %v584
        %v593 = vadd.f32 %v575, %v585
        %v594 = vadd.f32 %v576, %v582
        %v595 = vadd.f32 %v577, %v583
        %v596 = vadd.f32 %v578, %v584
        %v597 = vadd.f32 %v579, %v585
        %v598 = vmul.f32 %v590, 0.5
        %v599 = vmul.f32 %v591, 0.5
        %v600 = vmul.f32 %v592, 0.5
        %v601 = vmul.f32 %v593, 0.5
        %v602 = vmul.f32 %v594, 0.5
        %v603 = vmul.f32 %v595, 0.5
        %v604 = vmul.f32 %v596, 0.5
        %v605 = vmul.f32 %v597, 0.5
        %v606 = vmul.f32 %v590, %v590
        %v607 = vmul.f32 %v591, %v591
        %v608 = vmul.f32 %v592, %v592
        %v609 = vmul.f32 %v593, %v593
        %v610 = vmul.f32 %v594, %v594
        %v611 = vmul.f32 %v595, %v595
        %v612 = vmul.f32 %v596, %v596
        %v613 = vmul.f32 %v597, %v597
        %v614 = vmul.f32 %v606, %v590
        %v615 = vmul.f32 %v607, %v591
        %v616 = vmul.f32 %v608, %v592
        %v617 = vmul.f32 %v609, %v593
        %v618 = vmul.f32 %v610, %v594
        %v619 = vmul.f32 %v611, %v595
        %v620 = vmul.f32 %v612, %v596
        %v621 = vmul.f32 %v613, %v597
        %v622 = vmul.f32 %v614, 0.044715
        %v623 = vmul.f32 %v615, 0.044715
        %v624 = vmul.f32 %v616, 0.044715
        %v625 = vmul.f32 %v617, 0.044715
        %v626 = vmul.f32 %v618, 0.044715
        %v627 = vmul.f32 %v619, 0.044715
        %v628 = vmul.f32 %v620, 0.044715
        %v629 = vmul.f32 %v621, 0.044715
        %v630 = vadd.f32 %v590, %v622
        %v631 = vadd.f32 %v591, %v623
        %v632 = vadd.f32 %v592, %v624
        %v633 = vadd.f32 %v593, %v625
        %v634 = vadd.f32 %v594, %v626
        %v635 = vadd.f32 %v595, %v627
        %v636 = vadd.f32 %v596, %v628
        %v637 = vadd.f32 %v597, %v629
        %v638 = vmul.f32 %v630, 0.7978846
        %v639 = vmul.f32 %v631, 0.7978846
        %v640 = vmul.f32 %v632, 0.7978846
        %v641 = vmul.f32 %v633, 0.7978846
        %v642 = vmul.f32 %v634, 0.7978846
        %v643 = vmul.f32 %v635, 0.7978846
        %v644 = vmul.f32 %v636, 0.7978846
        %v645 = vmul.f32 %v637, 0.7978846
        %v646 = vtanh.pop %v638
        %v647 = vtanh.pop %v639
        %v648 = vtanh.pop %v640
        %v649 = vtanh.pop %v641
        %v650 = vtanh.pop %v642
        %v651 = vtanh.pop %v643
        %v652 = vtanh.pop %v644
        %v653 = vtanh.pop %v645
        %v654 = vadd.f32 %v646, 1.0
        %v655 = vadd.f32 %v647, 1.0
        %v656 = vadd.f32 %v648, 1.0
        %v657 = vadd.f32 %v649, 1.0
        %v658 = vadd.f32 %v650, 1.0
        %v659 = vadd.f32 %v651, 1.0
        %v660 = vadd.f32 %v652, 1.0
        %v661 = vadd.f32 %v653, 1.0
        %v662 = vmul.f32 %v598, %v654
        %v663 = vmul.f32 %v599, %v655
        %v664 = vmul.f32 %v600, %v656
        %v665 = vmul.f32 %v601, %v657
        %v666 = vmul.f32 %v602, %v658
        %v667 = vmul.f32 %v603, %v659
        %v668 = vmul.f32 %v604, %v660
        %v669 = vmul.f32 %v605, %v661
        %v670 = vpack.c.bf16 %v666, %v662
        %v671 = vpack.c.bf16 %v667, %v663
        %v672 = vpack.c.bf16 %v668, %v664
        %v673 = vpack.c.bf16 %v669, %v665
        %v674 = vld [vmem:[#allocation9] sm:$0xff]
        %v675 = vld [vmem:[#allocation9 + $0x8] sm:$0xff]
        %v676 = vld [vmem:[#allocation9 + $0x10] sm:$0xff]
        %v677 = vld [vmem:[#allocation9 + $0x18] sm:$0xff]
        %v678 = vld [vmem:[#allocation9 + $0x20] sm:$0xff]
        %v679 = vld [vmem:[#allocation9 + $0x28] sm:$0xff]
        %v680 = vld [vmem:[#allocation9 + $0x30] sm:$0xff]
        %v681 = vld [vmem:[#allocation9 + $0x38] sm:$0xff]
        %v682 = vld [vmem:[#allocation9 + $0x40] sm:$0xff]
        %v683 = vld [vmem:[#allocation9 + $0x48] sm:$0xff]
        %v684 = vld [vmem:[#allocation9 + $0x50] sm:$0xff]
        %v685 = vld [vmem:[#allocation9 + $0x58] sm:$0xff]
        %v686 = vld [vmem:[#allocation9 + $0x60] sm:$0xff]
        %v687 = vld [vmem:[#allocation9 + $0x68] sm:$0xff]
        %v688 = vld [vmem:[#allocation9 + $0x70] sm:$0xff]
        %v689 = vld [vmem:[#allocation9 + $0x78] sm:$0xff]
        %v690 = vld [vmem:[#allocation9 + $0x80] sm:$0xff]
        %v691 = vld [vmem:[#allocation9 + $0x88] sm:$0xff]
        %v692 = vld [vmem:[#allocation9 + $0x90] sm:$0xff]
        %v693 = vld [vmem:[#allocation9 + $0x98] sm:$0xff]
        %v694 = vld [vmem:[#allocation9 + $0xa0] sm:$0xff]
        %v695 = vld [vmem:[#allocation9 + $0xa8] sm:$0xff]
        %v696 = vld [vmem:[#allocation9 + $0xb0] sm:$0xff]
        %v697 = vld [vmem:[#allocation9 + $0xb8] sm:$0xff]
        %v698 = vld [vmem:[#allocation9 + $0xc0] sm:$0xff]
        %v699 = vld [vmem:[#allocation9 + $0xc8] sm:$0xff]
        %v700 = vld [vmem:[#allocation9 + $0xd0] sm:$0xff]
        %v701 = vld [vmem:[#allocation9 + $0xd8] sm:$0xff]
        %v702 = vld [vmem:[#allocation9 + $0xe0] sm:$0xff]
        %v703 = vld [vmem:[#allocation9 + $0xe8] sm:$0xff]
        %v704 = vld [vmem:[#allocation9 + $0xf0] sm:$0xff]
        %v705 = vld [vmem:[#allocation9 + $0xf8] sm:$0xff]
        %v706 = vld [vmem:[#allocation9 + $0x100] sm:$0xff]
        %v707 = vld [vmem:[#allocation9 + $0x108] sm:$0xff]
        %v708 = vld [vmem:[#allocation9 + $0x110] sm:$0xff]
        %v709 = vld [vmem:[#allocation9 + $0x118] sm:$0xff]
        %v710 = vld [vmem:[#allocation9 + $0x120] sm:$0xff]
        %v711 = vld [vmem:[#allocation9 + $0x128] sm:$0xff]
        %v712 = vld [vmem:[#allocation9 + $0x130] sm:$0xff]
        %v713 = vld [vmem:[#allocation9 + $0x138] sm:$0xff]
        %v714 = vld [vmem:[#allocation9 + $0x140] sm:$0xff]
        %v715 = vld [vmem:[#allocation9 + $0x148] sm:$0xff]
        %v716 = vld [vmem:[#allocation9 + $0x150] sm:$0xff]
        %v717 = vld [vmem:[#allocation9 + $0x158] sm:$0xff]
        %v718 = vld [vmem:[#allocation9 + $0x160] sm:$0xff]
        %v719 = vld [vmem:[#allocation9 + $0x168] sm:$0xff]
        %v720 = vld [vmem:[#allocation9 + $0x170] sm:$0xff]
        %v721 = vld [vmem:[#allocation9 + $0x178] sm:$0xff]
        %v722 = vld [vmem:[#allocation9 + $0x180] sm:$0xff]
        %v723 = vld [vmem:[#allocation9 + $0x188] sm:$0xff]
        %v724 = vld [vmem:[#allocation9 + $0x190] sm:$0xff]
        %v725 = vld [vmem:[#allocation9 + $0x198] sm:$0xff]
        %v726 = vld [vmem:[#allocation9 + $0x1a0] sm:$0xff]
        %v727 = vld [vmem:[#allocation9 + $0x1a8] sm:$0xff]
        %v728 = vld [vmem:[#allocation9 + $0x1b0] sm:$0xff]
        %v729 = vld [vmem:[#allocation9 + $0x1b8] sm:$0xff]
        %v730 = vld [vmem:[#allocation9 + $0x1c0] sm:$0xff]
        %v731 = vld [vmem:[#allocation9 + $0x1c8] sm:$0xff]
        %v732 = vld [vmem:[#allocation9 + $0x1d0] sm:$0xff]
        %v733 = vld [vmem:[#allocation9 + $0x1d8] sm:$0xff]
        %v734 = vld [vmem:[#allocation9 + $0x1e0] sm:$0xff]
        %v735 = vld [vmem:[#allocation9 + $0x1e8] sm:$0xff]
        %v736 = vld [vmem:[#allocation9 + $0x1f0] sm:$0xff]
        %v737 = vld [vmem:[#allocation9 + $0x1f8] sm:$0xff]
        %v738 = vld [vmem:[#allocation9 + $0x200] sm:$0xff]
        %v739 = vld [vmem:[#allocation9 + $0x208] sm:$0xff]
        %v740 = vld [vmem:[#allocation9 + $0x210] sm:$0xff]
        %v741 = vld [vmem:[#allocation9 + $0x218] sm:$0xff]
        %v742 = vld [vmem:[#allocation9 + $0x220] sm:$0xff]
        %v743 = vld [vmem:[#allocation9 + $0x228] sm:$0xff]
        %v744 = vld [vmem:[#allocation9 + $0x230] sm:$0xff]
        %v745 = vld [vmem:[#allocation9 + $0x238] sm:$0xff]
        %v746 = vld [vmem:[#allocation9 + $0x240] sm:$0xff]
        %v747 = vld [vmem:[#allocation9 + $0x248] sm:$0xff]
        %v748 = vld [vmem:[#allocation9 + $0x250] sm:$0xff]
        %v749 = vld [vmem:[#allocation9 + $0x258] sm:$0xff]
        %v750 = vld [vmem:[#allocation9 + $0x260] sm:$0xff]
        %v751 = vld [vmem:[#allocation9 + $0x268] sm:$0xff]
        %v752 = vld [vmem:[#allocation9 + $0x270] sm:$0xff]
        %v753 = vld [vmem:[#allocation9 + $0x278] sm:$0xff]
        %v754 = vld [vmem:[#allocation9 + $0x280] sm:$0xff]
        %v755 = vld [vmem:[#allocation9 + $0x288] sm:$0xff]
        %v756 = vld [vmem:[#allocation9 + $0x290] sm:$0xff]
        %v757 = vld [vmem:[#allocation9 + $0x298] sm:$0xff]
        %v758 = vld [vmem:[#allocation9 + $0x2a0] sm:$0xff]
        %v759 = vld [vmem:[#allocation9 + $0x2a8] sm:$0xff]
        %v760 = vld [vmem:[#allocation9 + $0x2b0] sm:$0xff]
        %v761 = vld [vmem:[#allocation9 + $0x2b8] sm:$0xff]
        %v762 = vld [vmem:[#allocation9 + $0x2c0] sm:$0xff]
        %v763 = vld [vmem:[#allocation9 + $0x2c8] sm:$0xff]
        %v764 = vld [vmem:[#allocation9 + $0x2d0] sm:$0xff]
        %v765 = vld [vmem:[#allocation9 + $0x2d8] sm:$0xff]
        %v766 = vld [vmem:[#allocation9 + $0x2e0] sm:$0xff]
        %v767 = vld [vmem:[#allocation9 + $0x2e8] sm:$0xff]
        %v768 = vld [vmem:[#allocation9 + $0x2f0] sm:$0xff]
        %v769 = vld [vmem:[#allocation9 + $0x2f8] sm:$0xff]
        %v770 = vld [vmem:[#allocation9 + $0x300] sm:$0xff]
        %v771 = vld [vmem:[#allocation9 + $0x308] sm:$0xff]
        %v772 = vld [vmem:[#allocation9 + $0x310] sm:$0xff]
        %v773 = vld [vmem:[#allocation9 + $0x318] sm:$0xff]
        %v774 = vld [vmem:[#allocation9 + $0x320] sm:$0xff]
        %v775 = vld [vmem:[#allocation9 + $0x328] sm:$0xff]
        %v776 = vld [vmem:[#allocation9 + $0x330] sm:$0xff]
        %v777 = vld [vmem:[#allocation9 + $0x338] sm:$0xff]
        %v778 = vld [vmem:[#allocation9 + $0x340] sm:$0xff]
        %v779 = vld [vmem:[#allocation9 + $0x348] sm:$0xff]
        %v780 = vld [vmem:[#allocation9 + $0x350] sm:$0xff]
        %v781 = vld [vmem:[#allocation9 + $0x358] sm:$0xff]
        %v782 = vld [vmem:[#allocation9 + $0x360] sm:$0xff]
        %v783 = vld [vmem:[#allocation9 + $0x368] sm:$0xff]
        %v784 = vld [vmem:[#allocation9 + $0x370] sm:$0xff]
        %v785 = vld [vmem:[#allocation9 + $0x378] sm:$0xff]
        %v786 = vld [vmem:[#allocation9 + $0x380] sm:$0xff]
        %v787 = vld [vmem:[#allocation9 + $0x388] sm:$0xff]
        %v788 = vld [vmem:[#allocation9 + $0x390] sm:$0xff]
        %v789 = vld [vmem:[#allocation9 + $0x398] sm:$0xff]
        %v790 = vld [vmem:[#allocation9 + $0x3a0] sm:$0xff]
        %v791 = vld [vmem:[#allocation9 + $0x3a8] sm:$0xff]
        %v792 = vld [vmem:[#allocation9 + $0x3b0] sm:$0xff]
        %v793 = vld [vmem:[#allocation9 + $0x3b8] sm:$0xff]
        %v794 = vld [vmem:[#allocation9 + $0x3c0] sm:$0xff]
        %v795 = vld [vmem:[#allocation9 + $0x3c8] sm:$0xff]
        %v796 = vld [vmem:[#allocation9 + $0x3d0] sm:$0xff]
        %v797 = vld [vmem:[#allocation9 + $0x3d8] sm:$0xff]
        %v798 = vld [vmem:[#allocation9 + $0x3e0] sm:$0xff]
        %v799 = vld [vmem:[#allocation9 + $0x3e8] sm:$0xff]
        %v800 = vld [vmem:[#allocation9 + $0x3f0] sm:$0xff]
        %v801 = vld [vmem:[#allocation9 + $0x3f8] sm:$0xff]
        %v802 = vld [vmem:[%s4] sm:$0xf]
        %v804 = vperm.slane %v802, 0
        %v805 = vperm.slane %v802, 1
        %v806 = vperm.slane %v802, 2
        %v807 = vperm.slane %v802, 3
        %v940 = vunpack.c.l.b16 %v674
        %v941 = vunpack.c.h.b16 %v674
        %v942 = vunpack.c.l.b16 %v675
        %v943 = vunpack.c.h.b16 %v675
        %v944 = vunpack.c.l.b16 %v676
        %v945 = vunpack.c.h.b16 %v676
        %v946 = vunpack.c.l.b16 %v677
        %v947 = vunpack.c.h.b16 %v677
        %v948 = vunpack.c.l.b16 %v678
        %v949 = vunpack.c.h.b16 %v678
        %v950 = vunpack.c.l.b16 %v679
        %v951 = vunpack.c.h.b16 %v679
        %v952 = vunpack.c.l.b16 %v680
        %v953 = vunpack.c.h.b16 %v680
        %v954 = vunpack.c.l.b16 %v681
        %v955 = vunpack.c.h.b16 %v681
        %v956 = vunpack.c.l.b16 %v682
        %v957 = vunpack.c.h.b16 %v682
        %v958 = vunpack.c.l.b16 %v683
        %v959 = vunpack.c.h.b16 %v683
        %v960 = vunpack.c.l.b16 %v684
        %v961 = vunpack.c.h.b16 %v684
        %v962 = vunpack.c.l.b16 %v685
        %v963 = vunpack.c.h.b16 %v685
        %v964 = vunpack.c.l.b16 %v686
        %v965 = vunpack.c.h.b16 %v686
        %v966 = vunpack.c.l.b16 %v687
        %v967 = vunpack.c.h.b16 %v687
        %v968 = vunpack.c.l.b16 %v688
        %v969 = vunpack.c.h.b16 %v688
        %v970 = vunpack.c.l.b16 %v689
        %v971 = vunpack.c.h.b16 %v689
        %v972 = vunpack.c.l.b16 %v690
        %v973 = vunpack.c.h.b16 %v690
        %v974 = vunpack.c.l.b16 %v691
        %v975 = vunpack.c.h.b16 %v691
        %v976 = vunpack.c.l.b16 %v692
        %v977 = vunpack.c.h.b16 %v692
        %v978 = vunpack.c.l.b16 %v693
        %v979 = vunpack.c.h.b16 %v693
        %v980 = vunpack.c.l.b16 %v694
        %v981 = vunpack.c.h.b16 %v694
        %v982 = vunpack.c.l.b16 %v695
        %v983 = vunpack.c.h.b16 %v695
        %v984 = vunpack.c.l.b16 %v696
        %v985 = vunpack.c.h.b16 %v696
        %v986 = vunpack.c.l.b16 %v697
        %v987 = vunpack.c.h.b16 %v697
        %v988 = vunpack.c.l.b16 %v698
        %v989 = vunpack.c.h.b16 %v698
        %v990 = vunpack.c.l.b16 %v699
        %v991 = vunpack.c.h.b16 %v699
        %v992 = vunpack.c.l.b16 %v700
        %v993 = vunpack.c.h.b16 %v700
        %v994 = vunpack.c.l.b16 %v701
        %v995 = vunpack.c.h.b16 %v701
        %v996 = vunpack.c.l.b16 %v702
        %v997 = vunpack.c.h.b16 %v702
        %v998 = vunpack.c.l.b16 %v703
        %v999 = vunpack.c.h.b16 %v703
        %v1000 = vunpack.c.l.b16 %v704
        %v1001 = vunpack.c.h.b16 %v704
        %v1002 = vunpack.c.l.b16 %v705
        %v1003 = vunpack.c.h.b16 %v705
        %v1004 = vunpack.c.l.b16 %v706
        %v1005 = vunpack.c.h.b16 %v706
        %v1006 = vunpack.c.l.b16 %v707
        %v1007 = vunpack.c.h.b16 %v707
        %v1008 = vunpack.c.l.b16 %v708
        %v1009 = vunpack.c.h.b16 %v708
        %v1010 = vunpack.c.l.b16 %v709
        %v1011 = vunpack.c.h.b16 %v709
        %v1012 = vunpack.c.l.b16 %v710
        %v1013 = vunpack.c.h.b16 %v710
        %v1014 = vunpack.c.l.b16 %v711
        %v1015 = vunpack.c.h.b16 %v711
        %v1016 = vunpack.c.l.b16 %v712
        %v1017 = vunpack.c.h.b16 %v712
        %v1018 = vunpack.c.l.b16 %v713
        %v1019 = vunpack.c.h.b16 %v713
        %v1020 = vunpack.c.l.b16 %v714
        %v1021 = vunpack.c.h.b16 %v714
        %v1022 = vunpack.c.l.b16 %v715
        %v1023 = vunpack.c.h.b16 %v715
        %v1024 = vunpack.c.l.b16 %v716
        %v1025 = vunpack.c.h.b16 %v716
        %v1026 = vunpack.c.l.b16 %v717
        %v1027 = vunpack.c.h.b16 %v717
        %v1028 = vunpack.c.l.b16 %v718
        %v1029 = vunpack.c.h.b16 %v718
        %v1030 = vunpack.c.l.b16 %v719
        %v1031 = vunpack.c.h.b16 %v719
        %v1032 = vunpack.c.l.b16 %v720
        %v1033 = vunpack.c.h.b16 %v720
        %v1034 = vunpack.c.l.b16 %v721
        %v1035 = vunpack.c.h.b16 %v721
        %v1036 = vunpack.c.l.b16 %v722
        %v1037 = vunpack.c.h.b16 %v722
        %v1038 = vunpack.c.l.b16 %v723
        %v1039 = vunpack.c.h.b16 %v723
        %v1040 = vunpack.c.l.b16 %v724
        %v1041 = vunpack.c.h.b16 %v724
        %v1042 = vunpack.c.l.b16 %v725
        %v1043 = vunpack.c.h.b16 %v725
        %v1044 = vunpack.c.l.b16 %v726
        %v1045 = vunpack.c.h.b16 %v726
        %v1046 = vunpack.c.l.b16 %v727
        %v1047 = vunpack.c.h.b16 %v727
        %v1048 = vunpack.c.l.b16 %v728
        %v1049 = vunpack.c.h.b16 %v728
        %v1050 = vunpack.c.l.b16 %v729
        %v1051 = vunpack.c.h.b16 %v729
        %v1052 = vunpack.c.l.b16 %v730
        %v1053 = vunpack.c.h.b16 %v730
        %v1054 = vunpack.c.l.b16 %v731
        %v1055 = vunpack.c.h.b16 %v731
        %v1056 = vunpack.c.l.b16 %v732
        %v1057 = vunpack.c.h.b16 %v732
        %v1058 = vunpack.c.l.b16 %v733
        %v1059 = vunpack.c.h.b16 %v733
        %v1060 = vunpack.c.l.b16 %v734
        %v1061 = vunpack.c.h.b16 %v734
        %v1062 = vunpack.c.l.b16 %v735
        %v1063 = vunpack.c.h.b16 %v735
        %v1064 = vunpack.c.l.b16 %v736
        %v1065 = vunpack.c.h.b16 %v736
        %v1066 = vunpack.c.l.b16 %v737
        %v1067 = vunpack.c.h.b16 %v737
        %v1068 = vunpack.c.l.b16 %v738
        %v1069 = vunpack.c.h.b16 %v738
        %v1070 = vunpack.c.l.b16 %v739
        %v1071 = vunpack.c.h.b16 %v739
        %v1072 = vunpack.c.l.b16 %v740
        %v1073 = vunpack.c.h.b16 %v740
        %v1074 = vunpack.c.l.b16 %v741
        %v1075 = vunpack.c.h.b16 %v741
        %v1076 = vunpack.c.l.b16 %v742
        %v1077 = vunpack.c.h.b16 %v742
        %v1078 = vunpack.c.l.b16 %v743
        %v1079 = vunpack.c.h.b16 %v743
        %v1080 = vunpack.c.l.b16 %v744
        %v1081 = vunpack.c.h.b16 %v744
        %v1082 = vunpack.c.l.b16 %v745
        %v1083 = vunpack.c.h.b16 %v745
        %v1084 = vunpack.c.l.b16 %v746
        %v1085 = vunpack.c.h.b16 %v746
        %v1086 = vunpack.c.l.b16 %v747
        %v1087 = vunpack.c.h.b16 %v747
        %v1088 = vunpack.c.l.b16 %v748
        %v1089 = vunpack.c.h.b16 %v748
        %v1090 = vunpack.c.l.b16 %v749
        %v1091 = vunpack.c.h.b16 %v749
        %v1092 = vunpack.c.l.b16 %v750
        %v1093 = vunpack.c.h.b16 %v750
        %v1094 = vunpack.c.l.b16 %v751
        %v1095 = vunpack.c.h.b16 %v751
        %v1096 = vunpack.c.l.b16 %v752
        %v1097 = vunpack.c.h.b16 %v752
        %v1098 = vunpack.c.l.b16 %v753
        %v1099 = vunpack.c.h.b16 %v753
        %v1100 = vunpack.c.l.b16 %v754
        %v1101 = vunpack.c.h.b16 %v754
        %v1102 = vunpack.c.l.b16 %v755
        %v1103 = vunpack.c.h.b16 %v755
        %v1104 = vunpack.c.l.b16 %v756
        %v1105 = vunpack.c.h.b16 %v756
        %v1106 = vunpack.c.l.b16 %v757
        %v1107 = vunpack.c.h.b16 %v757
        %v1108 = vunpack.c.l.b16 %v758
        %v1109 = vunpack.c.h.b16 %v758
        %v1110 = vunpack.c.l.b16 %v759
        %v1111 = vunpack.c.h.b16 %v759
        %v1112 = vunpack.c.l.b16 %v760
        %v1113 = vunpack.c.h.b16 %v760
        %v1114 = vunpack.c.l.b16 %v761
        %v1115 = vunpack.c.h.b16 %v761
        %v1116 = vunpack.c.l.b16 %v762
        %v1117 = vunpack.c.h.b16 %v762
        %v1118 = vunpack.c.l.b16 %v763
        %v1119 = vunpack.c.h.b16 %v763
        %v1120 = vunpack.c.l.b16 %v764
        %v1121 = vunpack.c.h.b16 %v764
        %v1122 = vunpack.c.l.b16 %v765
        %v1123 = vunpack.c.h.b16 %v765
        %v1124 = vunpack.c.l.b16 %v766
        %v1125 = vunpack.c.h.b16 %v766
        %v1126 = vunpack.c.l.b16 %v767
        %v1127 = vunpack.c.h.b16 %v767
        %v1128 = vunpack.c.l.b16 %v768
        %v1129 = vunpack.c.h.b16 %v768
        %v1130 = vunpack.c.l.b16 %v769
        %v1131 = vunpack.c.h.b16 %v769
        %v1132 = vunpack.c.l.b16 %v770
        %v1133 = vunpack.c.h.b16 %v770
        %v1134 = vunpack.c.l.b16 %v771
        %v1135 = vunpack.c.h.b16 %v771
        %v1136 = vunpack.c.l.b16 %v772
        %v1137 = vunpack.c.h.b16 %v772
        %v1138 = vunpack.c.l.b16 %v773
        %v1139 = vunpack.c.h.b16 %v773
        %v1140 = vunpack.c.l.b16 %v774
        %v1141 = vunpack.c.h.b16 %v774
        %v1142 = vunpack.c.l.b16 %v775
        %v1143 = vunpack.c.h.b16 %v775
        %v1144 = vunpack.c.l.b16 %v776
        %v1145 = vunpack.c.h.b16 %v776
        %v1146 = vunpack.c.l.b16 %v777
        %v1147 = vunpack.c.h.b16 %v777
        %v1148 = vunpack.c.l.b16 %v778
        %v1149 = vunpack.c.h.b16 %v778
        %v1150 = vunpack.c.l.b16 %v779
        %v1151 = vunpack.c.h.b16 %v779
        %v1152 = vunpack.c.l.b16 %v780
        %v1153 = vunpack.c.h.b16 %v780
        %v1154 = vunpack.c.l.b16 %v781
        %v1155 = vunpack.c.h.b16 %v781
        %v1156 = vunpack.c.l.b16 %v782
        %v1157 = vunpack.c.h.b16 %v782
        %v1158 = vunpack.c.l.b16 %v783
        %v1159 = vunpack.c.h.b16 %v783
        %v1160 = vunpack.c.l.b16 %v784
        %v1161 = vunpack.c.h.b16 %v784
        %v1162 = vunpack.c.l.b16 %v785
        %v1163 = vunpack.c.h.b16 %v785
        %v1164 = vunpack.c.l.b16 %v786
        %v1165 = vunpack.c.h.b16 %v786
        %v1166 = vunpack.c.l.b16 %v787
        %v1167 = vunpack.c.h.b16 %v787
        %v1168 = vunpack.c.l.b16 %v788
        %v1169 = vunpack.c.h.b16 %v788
        %v1170 = vunpack.c.l.b16 %v789
        %v1171 = vunpack.c.h.b16 %v789
        %v1172 = vunpack.c.l.b16 %v790
        %v1173 = vunpack.c.h.b16 %v790
        %v1174 = vunpack.c.l.b16 %v791
        %v1175 = vunpack.c.h.b16 %v791
        %v1176 = vunpack.c.l.b16 %v792
        %v1177 = vunpack.c.h.b16 %v792
        %v1178 = vunpack.c.l.b16 %v793
        %v1179 = vunpack.c.h.b16 %v793
        %v1180 = vunpack.c.l.b16 %v794
        %v1181 = vunpack.c.h.b16 %v794
        %v1182 = vunpack.c.l.b16 %v795
        %v1183 = vunpack.c.h.b16 %v795
        %v1184 = vunpack.c.l.b16 %v796
        %v1185 = vunpack.c.h.b16 %v796
        %v1186 = vunpack.c.l.b16 %v797
        %v1187 = vunpack.c.h.b16 %v797
        %v1188 = vunpack.c.l.b16 %v798
        %v1189 = vunpack.c.h.b16 %v798
        %v1190 = vunpack.c.l.b16 %v799
        %v1191 = vunpack.c.h.b16 %v799
        %v1192 = vunpack.c.l.b16 %v800
        %v1193 = vunpack.c.h.b16 %v800
        %v1194 = vunpack.c.l.b16 %v801
        %v1195 = vunpack.c.h.b16 %v801
        %v1196 = vpack.c.b16 %v944, %v940
        %v1197 = vpack.c.b16 %v945, %v941
        %v1198 = vpack.c.b16 %v946, %v942
        %v1199 = vpack.c.b16 %v947, %v943
        %v1200 = vpack.c.b16 %v952, %v948
        %v1201 = vpack.c.b16 %v953, %v949
        %v1202 = vpack.c.b16 %v954, %v950
        %v1203 = vpack.c.b16 %v955, %v951
        %v1204 = vpack.c.b16 %v960, %v956
        %v1205 = vpack.c.b16 %v961, %v957
        %v1206 = vpack.c.b16 %v962, %v958
        %v1207 = vpack.c.b16 %v963, %v959
        %v1208 = vpack.c.b16 %v968, %v964
        %v1209 = vpack.c.b16 %v969, %v965
        %v1210 = vpack.c.b16 %v970, %v966
        %v1211 = vpack.c.b16 %v971, %v967
        %v1212 = vpack.c.b16 %v976, %v972
        %v1213 = vpack.c.b16 %v977, %v973
        %v1214 = vpack.c.b16 %v978, %v974
        %v1215 = vpack.c.b16 %v979, %v975
        %v1216 = vpack.c.b16 %v984, %v980
        %v1217 = vpack.c.b16 %v985, %v981
        %v1218 = vpack.c.b16 %v986, %v982
        %v1219 = vpack.c.b16 %v987, %v983
        %v1220 = vpack.c.b16 %v992, %v988
        %v1221 = vpack.c.b16 %v993, %v989
        %v1222 = vpack.c.b16 %v994, %v990
        %v1223 = vpack.c.b16 %v995, %v991
        %v1224 = vpack.c.b16 %v1000, %v996
        %v1225 = vpack.c.b16 %v1001, %v997
        %v1226 = vpack.c.b16 %v1002, %v998
        %v1227 = vpack.c.b16 %v1003, %v999
        %v1228 = vpack.c.b16 %v1008, %v1004
        %v1229 = vpack.c.b16 %v1009, %v1005
        %v1230 = vpack.c.b16 %v1010, %v1006
        %v1231 = vpack.c.b16 %v1011, %v1007
        %v1232 = vpack.c.b16 %v1016, %v1012
        %v1233 = vpack.c.b16 %v1017, %v1013
        %v1234 = vpack.c.b16 %v1018, %v1014
        %v1235 = vpack.c.b16 %v1019, %v1015
        %v1236 = vpack.c.b16 %v1024, %v1020
        %v1237 = vpack.c.b16 %v1025, %v1021
        %v1238 = vpack.c.b16 %v1026, %v1022
        %v1239 = vpack.c.b16 %v1027, %v1023
        %v1240 = vpack.c.b16 %v1032, %v1028
        %v1241 = vpack.c.b16 %v1033, %v1029
        %v1242 = vpack.c.b16 %v1034, %v1030
        %v1243 = vpack.c.b16 %v1035, %v1031
        %v1244 = vpack.c.b16 %v1040, %v1036
        %v1245 = vpack.c.b16 %v1041, %v1037
        %v1246 = vpack.c.b16 %v1042, %v1038
        %v1247 = vpack.c.b16 %v1043, %v1039
        %v1248 = vpack.c.b16 %v1048, %v1044
        %v1249 = vpack.c.b16 %v1049, %v1045
        %v1250 = vpack.c.b16 %v1050, %v1046
        %v1251 = vpack.c.b16 %v1051, %v1047
        %v1252 = vpack.c.b16 %v1056, %v1052
        %v1253 = vpack.c.b16 %v1057, %v1053
        %v1254 = vpack.c.b16 %v1058, %v1054
        %v1255 = vpack.c.b16 %v1059, %v1055
        %v1256 = vpack.c.b16 %v1064, %v1060
        %v1257 = vpack.c.b16 %v1065, %v1061
        %v1258 = vpack.c.b16 %v1066, %v1062
        %v1259 = vpack.c.b16 %v1067, %v1063
        %v1260 = vpack.c.b16 %v1072, %v1068
        %v1261 = vpack.c.b16 %v1073, %v1069
        %v1262 = vpack.c.b16 %v1074, %v1070
        %v1263 = vpack.c.b16 %v1075, %v1071
        %v1264 = vpack.c.b16 %v1080, %v1076
        %v1265 = vpack.c.b16 %v1081, %v1077
        %v1266 = vpack.c.b16 %v1082, %v1078
        %v1267 = vpack.c.b16 %v1083, %v1079
        %v1268 = vpack.c.b16 %v1088, %v1084
        %v1269 = vpack.c.b16 %v1089, %v1085
        %v1270 = vpack.c.b16 %v1090, %v1086
        %v1271 = vpack.c.b16 %v1091, %v1087
        %v1272 = vpack.c.b16 %v1096, %v1092
        %v1273 = vpack.c.b16 %v1097, %v1093
        %v1274 = vpack.c.b16 %v1098, %v1094
        %v1275 = vpack.c.b16 %v1099, %v1095
        %v1276 = vpack.c.b16 %v1104, %v1100
        %v1277 = vpack.c.b16 %v1105, %v1101
        %v1278 = vpack.c.b16 %v1106, %v1102
        %v1279 = vpack.c.b16 %v1107, %v1103
        %v1280 = vpack.c.b16 %v1112, %v1108
        %v1281 = vpack.c.b16 %v1113, %v1109
        %v1282 = vpack.c.b16 %v1114, %v1110
        %v1283 = vpack.c.b16 %v1115, %v1111
        %v1284 = vpack.c.b16 %v1120, %v1116
        %v1285 = vpack.c.b16 %v1121, %v1117
        %v1286 = vpack.c.b16 %v1122, %v1118
        %v1287 = vpack.c.b16 %v1123, %v1119
        %v1288 = vpack.c.b16 %v1128, %v1124
        %v1289 = vpack.c.b16 %v1129, %v1125
        %v1290 = vpack.c.b16 %v1130, %v1126
        %v1291 = vpack.c.b16 %v1131, %v1127
        %v1292 = vpack.c.b16 %v1136, %v1132
        %v1293 = vpack.c.b16 %v1137, %v1133
        %v1294 = vpack.c.b16 %v1138, %v1134
        %v1295 = vpack.c.b16 %v1139, %v1135
        %v1296 = vpack.c.b16 %v1144, %v1140
        %v1297 = vpack.c.b16 %v1145, %v1141
        %v1298 = vpack.c.b16 %v1146, %v1142
        %v1299 = vpack.c.b16 %v1147, %v1143
        %v1300 = vpack.c.b16 %v1152, %v1148
        %v1301 = vpack.c.b16 %v1153, %v1149
        %v1302 = vpack.c.b16 %v1154, %v1150
        %v1303 = vpack.c.b16 %v1155, %v1151
        %v1304 = vpack.c.b16 %v1160, %v1156
        %v1305 = vpack.c.b16 %v1161, %v1157
        %v1306 = vpack.c.b16 %v1162, %v1158
        %v1307 = vpack.c.b16 %v1163, %v1159
        %v1308 = vpack.c.b16 %v1168, %v1164
        %v1309 = vpack.c.b16 %v1169, %v1165
        %v1310 = vpack.c.b16 %v1170, %v1166
        %v1311 = vpack.c.b16 %v1171, %v1167
        %v1312 = vpack.c.b16 %v1176, %v1172
        %v1313 = vpack.c.b16 %v1177, %v1173
        %v1314 = vpack.c.b16 %v1178, %v1174
        %v1315 = vpack.c.b16 %v1179, %v1175
        %v1316 = vpack.c.b16 %v1184, %v1180
        %v1317 = vpack.c.b16 %v1185, %v1181
        %v1318 = vpack.c.b16 %v1186, %v1182
        %v1319 = vpack.c.b16 %v1187, %v1183
        %v1320 = vpack.c.b16 %v1192, %v1188
        %v1321 = vpack.c.b16 %v1193, %v1189
        %v1322 = vpack.c.b16 %v1194, %v1190
        %v1323 = vpack.c.b16 %v1195, %v1191
        %1452 = vmatpush.bf16.msra.mxu0 %v1224
        %1453 = vmatpush.bf16.msra.mxu0 %v1220
        %1454 = vmatpush.bf16.msra.mxu0 %v1216
        %1455 = vmatpush.bf16.msra.mxu0 %v1212
        %1456 = vmatpush.bf16.msra.mxu0 %v1208
        %1457 = vmatpush.bf16.msra.mxu0 %v1204
        %1458 = vmatpush.bf16.msra.mxu0 %v1200
        %1459 = vmatpush.bf16.msra.mxu0 %v1196
        %1460 = vmatmul.bf16.gmra.mxu0 %v670
        %v1461 = vpop.f32.mrf.mxu0
        %v1462 = vadd.f32 %v804, %v1461
        %v1463 = vpop.f32.mrf.mxu0
        %v1464 = vadd.f32 %v804, %v1463
        %1465 = vdwg.mxu0
        %1466 = vmatpush.bf16.msra.mxu0 %v1256
        %1467 = vmatpush.bf16.msra.mxu0 %v1252
        %1468 = vmatpush.bf16.msra.mxu0 %v1248
        %1469 = vmatpush.bf16.msra.mxu0 %v1244
        %1470 = vmatpush.bf16.msra.mxu0 %v1240
        %1471 = vmatpush.bf16.msra.mxu0 %v1236
        %1472 = vmatpush.bf16.msra.mxu0 %v1232
        %1473 = vmatpush.bf16.msra.mxu0 %v1228
        %1474 = vmatmul.bf16.gmra.mxu0 %v671
        %v1475 = vpop.f32.mrf.mxu0
        %v1476 = vadd.f32 %v1462, %v1475
        %v1477 = vpop.f32.mrf.mxu0
        %v1478 = vadd.f32 %v1464, %v1477
        %1479 = vdwg.mxu0
        %1480 = vmatpush.bf16.msra.mxu0 %v1288
        %1481 = vmatpush.bf16.msra.mxu0 %v1284
        %1482 = vmatpush.bf16.msra.mxu0 %v1280
        %1483 = vmatpush.bf16.msra.mxu0 %v1276
        %1484 = vmatpush.bf16.msra.mxu0 %v1272
        %1485 = vmatpush.bf16.msra.mxu0 %v1268
        %1486 = vmatpush.bf16.msra.mxu0 %v1264
        %1487 = vmatpush.bf16.msra.mxu0 %v1260
        %1488 = vmatmul.bf16.gmra.mxu0 %v672
        %v1489 = vpop.f32.mrf.mxu0
        %v1490 = vadd.f32 %v1476, %v1489
        %v1491 = vpop.f32.mrf.mxu0
        %v1492 = vadd.f32 %v1478, %v1491
        %1493 = vdwg.mxu0
        %1494 = vmatpush.bf16.msra.mxu0 %v1320
        %1495 = vmatpush.bf16.msra.mxu0 %v1316
        %1496 = vmatpush.bf16.msra.mxu0 %v1312
        %1497 = vmatpush.bf16.msra.mxu0 %v1308
        %1498 = vmatpush.bf16.msra.mxu0 %v1304
        %1499 = vmatpush.bf16.msra.mxu0 %v1300
        %1500 = vmatpush.bf16.msra.mxu0 %v1296
        %1501 = vmatpush.bf16.msra.mxu0 %v1292
        %1502 = vmatmul.bf16.gmra.mxu0 %v673
        %v1503 = vpop.f32.mrf.mxu0
        %v1504 = vadd.f32 %v1490, %v1503
        %v1505 = vpop.f32.mrf.mxu0
        %v1506 = vadd.f32 %v1492, %v1505
        %1507 = vdwg.mxu0
        %1508 = vmatpush.bf16.msra.mxu0 %v1225
        %1509 = vmatpush.bf16.msra.mxu0 %v1221
        %1510 = vmatpush.bf16.msra.mxu0 %v1217
        %1511 = vmatpush.bf16.msra.mxu0 %v1213
        %1512 = vmatpush.bf16.msra.mxu0 %v1209
        %1513 = vmatpush.bf16.msra.mxu0 %v1205
        %1514 = vmatpush.bf16.msra.mxu0 %v1201
        %1515 = vmatpush.bf16.msra.mxu0 %v1197
        %1516 = vmatmul.bf16.gmra.mxu0 %v670
        %v1517 = vpop.f32.mrf.mxu0
        %v1518 = vadd.f32 %v805, %v1517
        %v1519 = vpop.f32.mrf.mxu0
        %v1520 = vadd.f32 %v805, %v1519
        %1521 = vdwg.mxu0
        %1522 = vmatpush.bf16.msra.mxu0 %v1257
        %1523 = vmatpush.bf16.msra.mxu0 %v1253
        %1524 = vmatpush.bf16.msra.mxu0 %v1249
        %1525 = vmatpush.bf16.msra.mxu0 %v1245
        %1526 = vmatpush.bf16.msra.mxu0 %v1241
        %1527 = vmatpush.bf16.msra.mxu0 %v1237
        %1528 = vmatpush.bf16.msra.mxu0 %v1233
        %1529 = vmatpush.bf16.msra.mxu0 %v1229
        %1530 = vmatmul.bf16.gmra.mxu0 %v671
        %v1531 = vpop.f32.mrf.mxu0
        %v1532 = vadd.f32 %v1518, %v1531
        %v1533 = vpop.f32.mrf.mxu0
        %v1534 = vadd.f32 %v1520, %v1533
        %1535 = vdwg.mxu0
        %1536 = vmatpush.bf16.msra.mxu0 %v1289
        %1537 = vmatpush.bf16.msra.mxu0 %v1285
        %1538 = vmatpush.bf16.msra.mxu0 %v1281
        %1539 = vmatpush.bf16.msra.mxu0 %v1277
        %1540 = vmatpush.bf16.msra.mxu0 %v1273
        %1541 = vmatpush.bf16.msra.mxu0 %v1269
        %1542 = vmatpush.bf16.msra.mxu0 %v1265
        %1543 = vmatpush.bf16.msra.mxu0 %v1261
        %1544 = vmatmul.bf16.gmra.mxu0 %v672
        %v1545 = vpop.f32.mrf.mxu0
        %v1546 = vadd.f32 %v1532, %v1545
        %v1547 = vpop.f32.mrf.mxu0
        %v1548 = vadd.f32 %v1534, %v1547
        %1549 = vdwg.mxu0
        %1550 = vmatpush.bf16.msra.mxu0 %v1321
        %1551 = vmatpush.bf16.msra.mxu0 %v1317
        %1552 = vmatpush.bf16.msra.mxu0 %v1313
        %1553 = vmatpush.bf16.msra.mxu0 %v1309
        %1554 = vmatpush.bf16.msra.mxu0 %v1305
        %1555 = vmatpush.bf16.msra.mxu0 %v1301
        %1556 = vmatpush.bf16.msra.mxu0 %v1297
        %1557 = vmatpush.bf16.msra.mxu0 %v1293
        %1558 = vmatmul.bf16.gmra.mxu0 %v673
        %v1559 = vpop.f32.mrf.mxu0
        %v1560 = vadd.f32 %v1546, %v1559
        %v1561 = vpop.f32.mrf.mxu0
        %v1562 = vadd.f32 %v1548, %v1561
        %1563 = vdwg.mxu0
        %1564 = vmatpush.bf16.msra.mxu0 %v1226
        %1565 = vmatpush.bf16.msra.mxu0 %v1222
        %1566 = vmatpush.bf16.msra.mxu0 %v1218
        %1567 = vmatpush.bf16.msra.mxu0 %v1214
        %1568 = vmatpush.bf16.msra.mxu0 %v1210
        %1569 = vmatpush.bf16.msra.mxu0 %v1206
        %1570 = vmatpush.bf16.msra.mxu0 %v1202
        %1571 = vmatpush.bf16.msra.mxu0 %v1198
        %1572 = vmatmul.bf16.gmra.mxu0 %v670
        %v1573 = vpop.f32.mrf.mxu0
        %v1574 = vadd.f32 %v806, %v1573
        %v1575 = vpop.f32.mrf.mxu0
        %v1576 = vadd.f32 %v806, %v1575
        %1577 = vdwg.mxu0
        %1578 = vmatpush.bf16.msra.mxu0 %v1258
        %1579 = vmatpush.bf16.msra.mxu0 %v1254
        %1580 = vmatpush.bf16.msra.mxu0 %v1250
        %1581 = vmatpush.bf16.msra.mxu0 %v1246
        %1582 = vmatpush.bf16.msra.mxu0 %v1242
        %1583 = vmatpush.bf16.msra.mxu0 %v1238
        %1584 = vmatpush.bf16.msra.mxu0 %v1234
        %1585 = vmatpush.bf16.msra.mxu0 %v1230
        %1586 = vmatmul.bf16.gmra.mxu0 %v671
        %v1587 = vpop.f32.mrf.mxu0
        %v1588 = vadd.f32 %v1574, %v1587
        %v1589 = vpop.f32.mrf.mxu0
        %v1590 = vadd.f32 %v1576, %v1589
        %1591 = vdwg.mxu0
        %1592 = vmatpush.bf16.msra.mxu0 %v1290
        %1593 = vmatpush.bf16.msra.mxu0 %v1286
        %1594 = vmatpush.bf16.msra.mxu0 %v1282
        %1595 = vmatpush.bf16.msra.mxu0 %v1278
        %1596 = vmatpush.bf16.msra.mxu0 %v1274
        %1597 = vmatpush.bf16.msra.mxu0 %v1270
        %1598 = vmatpush.bf16.msra.mxu0 %v1266
        %1599 = vmatpush.bf16.msra.mxu0 %v1262
        %1600 = vmatmul.bf16.gmra.mxu0 %v672
        %v1601 = vpop.f32.mrf.mxu0
        %v1602 = vadd.f32 %v1588, %v1601
        %v1603 = vpop.f32.mrf.mxu0
        %v1604 = vadd.f32 %v1590, %v1603
        %1605 = vdwg.mxu0
        %1606 = vmatpush.bf16.msra.mxu0 %v1322
        %1607 = vmatpush.bf16.msra.mxu0 %v1318
        %1608 = vmatpush.bf16.msra.mxu0 %v1314
        %1609 = vmatpush.bf16.msra.mxu0 %v1310
        %1610 = vmatpush.bf16.msra.mxu0 %v1306
        %1611 = vmatpush.bf16.msra.mxu0 %v1302
        %1612 = vmatpush.bf16.msra.mxu0 %v1298
        %1613 = vmatpush.bf16.msra.mxu0 %v1294
        %1614 = vmatmul.bf16.gmra.mxu0 %v673
        %v1615 = vpop.f32.mrf.mxu0
        %v1616 = vadd.f32 %v1602, %v1615
        %v1617 = vpop.f32.mrf.mxu0
        %v1618 = vadd.f32 %v1604, %v1617
        %1619 = vdwg.mxu0
        %1620 = vmatpush.bf16.msra.mxu0 %v1227
        %1621 = vmatpush.bf16.msra.mxu0 %v1223
        %1622 = vmatpush.bf16.msra.mxu0 %v1219
        %1623 = vmatpush.bf16.msra.mxu0 %v1215
        %1624 = vmatpush.bf16.msra.mxu0 %v1211
        %1625 = vmatpush.bf16.msra.mxu0 %v1207
        %1626 = vmatpush.bf16.msra.mxu0 %v1203
        %1627 = vmatpush.bf16.msra.mxu0 %v1199
        %1628 = vmatmul.bf16.gmra.mxu0 %v670
        %v1629 = vpop.f32.mrf.mxu0
        %v1630 = vadd.f32 %v807, %v1629
        %v1631 = vpop.f32.mrf.mxu0
        %v1632 = vadd.f32 %v807, %v1631
        %1633 = vdwg.mxu0
        %1634 = vmatpush.bf16.msra.mxu0 %v1259
        %1635 = vmatpush.bf16.msra.mxu0 %v1255
        %1636 = vmatpush.bf16.msra.mxu0 %v1251
        %1637 = vmatpush.bf16.msra.mxu0 %v1247
        %1638 = vmatpush.bf16.msra.mxu0 %v1243
        %1639 = vmatpush.bf16.msra.mxu0 %v1239
        %1640 = vmatpush.bf16.msra.mxu0 %v1235
        %1641 = vmatpush.bf16.msra.mxu0 %v1231
        %1642 = vmatmul.bf16.gmra.mxu0 %v671
        %v1643 = vpop.f32.mrf.mxu0
        %v1644 = vadd.f32 %v1630, %v1643
        %v1645 = vpop.f32.mrf.mxu0
        %v1646 = vadd.f32 %v1632, %v1645
        %1647 = vdwg.mxu0
        %1648 = vmatpush.bf16.msra.mxu0 %v1291
        %1649 = vmatpush.bf16.msra.mxu0 %v1287
        %1650 = vmatpush.bf16.msra.mxu0 %v1283
        %1651 = vmatpush.bf16.msra.mxu0 %v1279
        %1652 = vmatpush.bf16.msra.mxu0 %v1275
        %1653 = vmatpush.bf16.msra.mxu0 %v1271
        %1654 = vmatpush.bf16.msra.mxu0 %v1267
        %1655 = vmatpush.bf16.msra.mxu0 %v1263
        %1656 = vmatmul.bf16.gmra.mxu0 %v672
        %v1657 = vpop.f32.mrf.mxu0
        %v1658 = vadd.f32 %v1644, %v1657
        %v1659 = vpop.f32.mrf.mxu0
        %v1660 = vadd.f32 %v1646, %v1659
        %1661 = vdwg.mxu0
        %1662 = vmatpush.bf16.msra.mxu0 %v1323
        %1663 = vmatpush.bf16.msra.mxu0 %v1319
        %1664 = vmatpush.bf16.msra.mxu0 %v1315
        %1665 = vmatpush.bf16.msra.mxu0 %v1311
        %1666 = vmatpush.bf16.msra.mxu0 %v1307
        %1667 = vmatpush.bf16.msra.mxu0 %v1303
        %1668 = vmatpush.bf16.msra.mxu0 %v1299
        %1669 = vmatpush.bf16.msra.mxu0 %v1295
        %1670 = vmatmul.bf16.gmra.mxu0 %v673
        %v1671 = vpop.f32.mrf.mxu0
        %v1672 = vadd.f32 %v1658, %v1671
        %v1673 = vpop.f32.mrf.mxu0
        %v1674 = vadd.f32 %v1660, %v1673
        %1675 = vdwg.mxu0
        %v1676 = vadd.f32 %v1504, %v1560
        %v1677 = vadd.f32 %v1676, %v1616
        %v1678 = vadd.f32 %v1677, %v1672
        %1679 = vadd.xlane.f32.xlu0 %v1678
        %v1680 = vpop.xlane.xlu0 %1679
        %v1681 = vadd.f32 %v1506, %v1562
        %v1682 = vadd.f32 %v1681, %v1618
        %v1683 = vadd.f32 %v1682, %v1674
        %1684 = vadd.xlane.f32.xlu0 %v1683
        %v1685 = vpop.xlane.xlu0 %1684
        %v1686 = vmul.f32 %v1680, %v501
        %v1687 = vmul.f32 %v1685, %v501
        %v1688 = vsub.f32 %v1504, %v1686
        %v1689 = vsub.f32 %v1560, %v1686
        %v1690 = vsub.f32 %v1616, %v1686
        %v1691 = vsub.f32 %v1672, %v1686
        %v1692 = vsub.f32 %v1506, %v1687
        %v1693 = vsub.f32 %v1562, %v1687
        %v1694 = vsub.f32 %v1618, %v1687
        %v1695 = vsub.f32 %v1674, %v1687
        %v1696 = vmul.f32 %v1688, %v1688
        %v1697 = vmul.f32 %v1689, %v1689
        %v1698 = vmul.f32 %v1690, %v1690
        %v1699 = vmul.f32 %v1691, %v1691
        %v1700 = vmul.f32 %v1692, %v1692
        %v1701 = vmul.f32 %v1693, %v1693
        %v1702 = vmul.f32 %v1694, %v1694
        %v1703 = vmul.f32 %v1695, %v1695
        %v1704 = vadd.f32 %v1696, %v1697
        %v1705 = vadd.f32 %v1704, %v1698
        %v1706 = vadd.f32 %v1705, %v1699
        %1707 = vadd.xlane.f32.xlu0 %v1706
        %v1708 = vpop.xlane.xlu0 %1707
        %v1709 = vadd.f32 %v1700, %v1701
        %v1710 = vadd.f32 %v1709, %v1702
        %v1711 = vadd.f32 %v1710, %v1703
        %1712 = vadd.xlane.f32.xlu0 %v1711
        %v1713 = vpop.xlane.xlu0 %1712
        %v1714 = vmul.f32 %v1708, %v501
        %v1715 = vmul.f32 %v1713, %v501
        %v1716 = vadd.f32 %v1714, 1e-05
        %v1717 = vadd.f32 %v1715, 1e-05
        %v1718 = vrsqrt.pop %v1716
        %v1719 = vmul.f32 %v1718, %v1716
        %v1720 = vmul.f32 %v1719, %v1718
        %v1721 = vmul.f32 0.5, %v1720
        %v1722 = vsub.f32 1.5, %v1721
        %v1723 = vmul.f32 %v1718, %v1722
        %vm1724 = vweird.f32 %v1716
        %vm1725 = vweird.f32 %v1718
        %vm1726 = vmor %vm1724, %vm1725
        %v1727 = vsel %vm1726, %v1718, %v1723
        %v1728 = vrsqrt.pop %v1717
        %v1729 = vmul.f32 %v1728, %v1717
        %v1730 = vmul.f32 %v1729, %v1728
        %v1731 = vmul.f32 0.5, %v1730
        %v1732 = vsub.f32 1.5, %v1731
        %v1733 = vmul.f32 %v1728, %v1732
        %vm1734 = vweird.f32 %v1717
        %vm1735 = vweird.f32 %v1728
        %vm1736 = vmor %vm1734, %vm1735
        %v1737 = vsel %vm1736, %v1728, %v1733
        %v1738 = vmul.f32 %v1688, %v1727
        %v1739 = vmul.f32 %v1689, %v1727
        %v1740 = vmul.f32 %v1690, %v1727
        %v1741 = vmul.f32 %v1691, %v1727
        %v1742 = vmul.f32 %v1692, %v1737
        %v1743 = vmul.f32 %v1693, %v1737
        %v1744 = vmul.f32 %v1694, %v1737
        %v1745 = vmul.f32 %v1695, %v1737
        %v1746 = vld [vmem:[%s5] sm:$0xf]
        %v1748 = vperm.slane %v1746, 0
        %v1749 = vperm.slane %v1746, 1
        %v1750 = vperm.slane %v1746, 2
        %v1751 = vperm.slane %v1746, 3
        %v1756 = vmul.f32 %v1738, %v1748
        %v1757 = vmul.f32 %v1739, %v1749
        %v1758 = vmul.f32 %v1740, %v1750
        %v1759 = vmul.f32 %v1741, %v1751
        %v1760 = vmul.f32 %v1742, %v1748
        %v1761 = vmul.f32 %v1743, %v1749
        %v1762 = vmul.f32 %v1744, %v1750
        %v1763 = vmul.f32 %v1745, %v1751
        %v1764 = vld [vmem:[%s6] sm:$0xf]
        %v1766 = vperm.slane %v1764, 0
        %v1767 = vperm.slane %v1764, 1
        %v1768 = vperm.slane %v1764, 2
        %v1769 = vperm.slane %v1764, 3
        %v1774 = vadd.f32 %v1756, %v1766
        %v1775 = vadd.f32 %v1757, %v1767
        %v1776 = vadd.f32 %v1758, %v1768
        %v1777 = vadd.f32 %v1759, %v1769
        %v1778 = vadd.f32 %v1760, %v1766
        %v1779 = vadd.f32 %v1761, %v1767
        %v1780 = vadd.f32 %v1762, %v1768
        %v1781 = vadd.f32 %v1763, %v1769
        %v1782 = vmul.f32 %v1774, 0.5
        %v1783 = vmul.f32 %v1775, 0.5
        %v1784 = vmul.f32 %v1776, 0.5
        %v1785 = vmul.f32 %v1777, 0.5
        %v1786 = vmul.f32 %v1778, 0.5
        %v1787 = vmul.f32 %v1779, 0.5
        %v1788 = vmul.f32 %v1780, 0.5
        %v1789 = vmul.f32 %v1781, 0.5
        %v1790 = vmul.f32 %v1774, %v1774
        %v1791 = vmul.f32 %v1775, %v1775
        %v1792 = vmul.f32 %v1776, %v1776
        %v1793 = vmul.f32 %v1777, %v1777
        %v1794 = vmul.f32 %v1778, %v1778
        %v1795 = vmul.f32 %v1779, %v1779
        %v1796 = vmul.f32 %v1780, %v1780
        %v1797 = vmul.f32 %v1781, %v1781
        %v1798 = vmul.f32 %v1790, %v1774
        %v1799 = vmul.f32 %v1791, %v1775
        %v1800 = vmul.f32 %v1792, %v1776
        %v1801 = vmul.f32 %v1793, %v1777
        %v1802 = vmul.f32 %v1794, %v1778
        %v1803 = vmul.f32 %v1795, %v1779
        %v1804 = vmul.f32 %v1796, %v1780
        %v1805 = vmul.f32 %v1797, %v1781
        %v1806 = vmul.f32 %v1798, 0.044715
        %v1807 = vmul.f32 %v1799, 0.044715
        %v1808 = vmul.f32 %v1800, 0.044715
        %v1809 = vmul.f32 %v1801, 0.044715
        %v1810 = vmul.f32 %v1802, 0.044715
        %v1811 = vmul.f32 %v1803, 0.044715
        %v1812 = vmul.f32 %v1804, 0.044715
        %v1813 = vmul.f32 %v1805, 0.044715
        %v1814 = vadd.f32 %v1774, %v1806
        %v1815 = vadd.f32 %v1775, %v1807
        %v1816 = vadd.f32 %v1776, %v1808
        %v1817 = vadd.f32 %v1777, %v1809
        %v1818 = vadd.f32 %v1778, %v1810
        %v1819 = vadd.f32 %v1779, %v1811
        %v1820 = vadd.f32 %v1780, %v1812
        %v1821 = vadd.f32 %v1781, %v1813
        %v1822 = vmul.f32 %v1814, 0.7978846
        %v1823 = vmul.f32 %v1815, 0.7978846
        %v1824 = vmul.f32 %v1816, 0.7978846
        %v1825 = vmul.f32 %v1817, 0.7978846
        %v1826 = vmul.f32 %v1818, 0.7978846
        %v1827 = vmul.f32 %v1819, 0.7978846
        %v1828 = vmul.f32 %v1820, 0.7978846
        %v1829 = vmul.f32 %v1821, 0.7978846
        %v1830 = vtanh.pop %v1822
        %v1831 = vtanh.pop %v1823
        %v1832 = vtanh.pop %v1824
        %v1833 = vtanh.pop %v1825
        %v1834 = vtanh.pop %v1826
        %v1835 = vtanh.pop %v1827
        %v1836 = vtanh.pop %v1828
        %v1837 = vtanh.pop %v1829
        %v1838 = vadd.f32 %v1830, 1.0
        %v1839 = vadd.f32 %v1831, 1.0
        %v1840 = vadd.f32 %v1832, 1.0
        %v1841 = vadd.f32 %v1833, 1.0
        %v1842 = vadd.f32 %v1834, 1.0
        %v1843 = vadd.f32 %v1835, 1.0
        %v1844 = vadd.f32 %v1836, 1.0
        %v1845 = vadd.f32 %v1837, 1.0
        %v1846 = vmul.f32 %v1782, %v1838
        %v1847 = vmul.f32 %v1783, %v1839
        %v1848 = vmul.f32 %v1784, %v1840
        %v1849 = vmul.f32 %v1785, %v1841
        %v1850 = vmul.f32 %v1786, %v1842
        %v1851 = vmul.f32 %v1787, %v1843
        %v1852 = vmul.f32 %v1788, %v1844
        %v1853 = vmul.f32 %v1789, %v1845
        %v1854 = vpack.c.bf16 %v1850, %v1846
        %v1855 = vpack.c.bf16 %v1851, %v1847
        %v1856 = vpack.c.bf16 %v1852, %v1848
        %v1857 = vpack.c.bf16 %v1853, %v1849
        %v1858 = vld [vmem:[#allocation11] sm:$0xf]
        %v1859 = vld [vmem:[#allocation11 + $0x4] sm:$0xf]
        %v1860 = vld [vmem:[#allocation11 + $0x8] sm:$0xf]
        %v1861 = vld [vmem:[#allocation11 + $0xc] sm:$0xf]
        %v1862 = vld [vmem:[#allocation11 + $0x10] sm:$0xf]
        %v1863 = vld [vmem:[#allocation11 + $0x14] sm:$0xf]
        %v1864 = vld [vmem:[#allocation11 + $0x18] sm:$0xf]
        %v1865 = vld [vmem:[#allocation11 + $0x1c] sm:$0xf]
        %v1866 = vld [vmem:[#allocation11 + $0x20] sm:$0xf]
        %v1867 = vld [vmem:[#allocation11 + $0x24] sm:$0xf]
        %v1868 = vld [vmem:[#allocation11 + $0x28] sm:$0xf]
        %v1869 = vld [vmem:[#allocation11 + $0x2c] sm:$0xf]
        %v1870 = vld [vmem:[#allocation11 + $0x30] sm:$0xf]
        %v1871 = vld [vmem:[#allocation11 + $0x34] sm:$0xf]
        %v1872 = vld [vmem:[#allocation11 + $0x38] sm:$0xf]
        %v1873 = vld [vmem:[#allocation11 + $0x3c] sm:$0xf]
        %v1874 = vld [vmem:[#allocation11 + $0x40] sm:$0xf]
        %v1875 = vld [vmem:[#allocation11 + $0x44] sm:$0xf]
        %v1876 = vld [vmem:[#allocation11 + $0x48] sm:$0xf]
        %v1877 = vld [vmem:[#allocation11 + $0x4c] sm:$0xf]
        %v1878 = vld [vmem:[#allocation11 + $0x50] sm:$0xf]
        %v1879 = vld [vmem:[#allocation11 + $0x54] sm:$0xf]
        %v1880 = vld [vmem:[#allocation11 + $0x58] sm:$0xf]
        %v1881 = vld [vmem:[#allocation11 + $0x5c] sm:$0xf]
        %v1882 = vld [vmem:[#allocation11 + $0x60] sm:$0xf]
        %v1883 = vld [vmem:[#allocation11 + $0x64] sm:$0xf]
        %v1884 = vld [vmem:[#allocation11 + $0x68] sm:$0xf]
        %v1885 = vld [vmem:[#allocation11 + $0x6c] sm:$0xf]
        %v1886 = vld [vmem:[#allocation11 + $0x70] sm:$0xf]
        %v1887 = vld [vmem:[#allocation11 + $0x74] sm:$0xf]
        %v1888 = vld [vmem:[#allocation11 + $0x78] sm:$0xf]
        %v1889 = vld [vmem:[#allocation11 + $0x7c] sm:$0xf]
        %v1890 = vld [vmem:[#allocation11 + $0x80] sm:$0xf]
        %v1891 = vld [vmem:[#allocation11 + $0x84] sm:$0xf]
        %v1892 = vld [vmem:[#allocation11 + $0x88] sm:$0xf]
        %v1893 = vld [vmem:[#allocation11 + $0x8c] sm:$0xf]
        %v1894 = vld [vmem:[#allocation11 + $0x90] sm:$0xf]
        %v1895 = vld [vmem:[#allocation11 + $0x94] sm:$0xf]
        %v1896 = vld [vmem:[#allocation11 + $0x98] sm:$0xf]
        %v1897 = vld [vmem:[#allocation11 + $0x9c] sm:$0xf]
        %v1898 = vld [vmem:[#allocation11 + $0xa0] sm:$0xf]
        %v1899 = vld [vmem:[#allocation11 + $0xa4] sm:$0xf]
        %v1900 = vld [vmem:[#allocation11 + $0xa8] sm:$0xf]
        %v1901 = vld [vmem:[#allocation11 + $0xac] sm:$0xf]
        %v1902 = vld [vmem:[#allocation11 + $0xb0] sm:$0xf]
        %v1903 = vld [vmem:[#allocation11 + $0xb4] sm:$0xf]
        %v1904 = vld [vmem:[#allocation11 + $0xb8] sm:$0xf]
        %v1905 = vld [vmem:[#allocation11 + $0xbc] sm:$0xf]
        %v1906 = vld [vmem:[#allocation11 + $0xc0] sm:$0xf]
        %v1907 = vld [vmem:[#allocation11 + $0xc4] sm:$0xf]
        %v1908 = vld [vmem:[#allocation11 + $0xc8] sm:$0xf]
        %v1909 = vld [vmem:[#allocation11 + $0xcc] sm:$0xf]
        %v1910 = vld [vmem:[#allocation11 + $0xd0] sm:$0xf]
        %v1911 = vld [vmem:[#allocation11 + $0xd4] sm:$0xf]
        %v1912 = vld [vmem:[#allocation11 + $0xd8] sm:$0xf]
        %v1913 = vld [vmem:[#allocation11 + $0xdc] sm:$0xf]
        %v1914 = vld [vmem:[#allocation11 + $0xe0] sm:$0xf]
        %v1915 = vld [vmem:[#allocation11 + $0xe4] sm:$0xf]
        %v1916 = vld [vmem:[#allocation11 + $0xe8] sm:$0xf]
        %v1917 = vld [vmem:[#allocation11 + $0xec] sm:$0xf]
        %v1918 = vld [vmem:[#allocation11 + $0xf0] sm:$0xf]
        %v1919 = vld [vmem:[#allocation11 + $0xf4] sm:$0xf]
        %v1920 = vld [vmem:[#allocation11 + $0xf8] sm:$0xf]
        %v1921 = vld [vmem:[#allocation11 + $0xfc] sm:$0xf]
        %v1922 = vld [vmem:[%s8] sm:$0x1]
        %v1924 = vperm.slane %v1922, 0
        %v1990 = vunpack.c.l.b16 %v1858
        %v1991 = vunpack.c.l.b16 %v1859
        %v1992 = vunpack.c.l.b16 %v1860
        %v1993 = vunpack.c.l.b16 %v1861
        %v1994 = vunpack.c.l.b16 %v1862
        %v1995 = vunpack.c.l.b16 %v1863
        %v1996 = vunpack.c.l.b16 %v1864
        %v1997 = vunpack.c.l.b16 %v1865
        %v1998 = vunpack.c.l.b16 %v1866
        %v1999 = vunpack.c.l.b16 %v1867
        %v2000 = vunpack.c.l.b16 %v1868
        %v2001 = vunpack.c.l.b16 %v1869
        %v2002 = vunpack.c.l.b16 %v1870
        %v2003 = vunpack.c.l.b16 %v1871
        %v2004 = vunpack.c.l.b16 %v1872
        %v2005 = vunpack.c.l.b16 %v1873
        %v2006 = vunpack.c.l.b16 %v1874
        %v2007 = vunpack.c.l.b16 %v1875
        %v2008 = vunpack.c.l.b16 %v1876
        %v2009 = vunpack.c.l.b16 %v1877
        %v2010 = vunpack.c.l.b16 %v1878
        %v2011 = vunpack.c.l.b16 %v1879
        %v2012 = vunpack.c.l.b16 %v1880
        %v2013 = vunpack.c.l.b16 %v1881
        %v2014 = vunpack.c.l.b16 %v1882
        %v2015 = vunpack.c.l.b16 %v1883
        %v2016 = vunpack.c.l.b16 %v1884
        %v2017 = vunpack.c.l.b16 %v1885
        %v2018 = vunpack.c.l.b16 %v1886
        %v2019 = vunpack.c.l.b16 %v1887
        %v2020 = vunpack.c.l.b16 %v1888
        %v2021 = vunpack.c.l.b16 %v1889
        %v2022 = vunpack.c.l.b16 %v1890
        %v2023 = vunpack.c.l.b16 %v1891
        %v2024 = vunpack.c.l.b16 %v1892
        %v2025 = vunpack.c.l.b16 %v1893
        %v2026 = vunpack.c.l.b16 %v1894
        %v2027 = vunpack.c.l.b16 %v1895
        %v2028 = vunpack.c.l.b16 %v1896
        %v2029 = vunpack.c.l.b16 %v1897
        %v2030 = vunpack.c.l.b16 %v1898
        %v2031 = vunpack.c.l.b16 %v1899
        %v2032 = vunpack.c.l.b16 %v1900
        %v2033 = vunpack.c.l.b16 %v1901
        %v2034 = vunpack.c.l.b16 %v1902
        %v2035 = vunpack.c.l.b16 %v1903
        %v2036 = vunpack.c.l.b16 %v1904
        %v2037 = vunpack.c.l.b16 %v1905
        %v2038 = vunpack.c.l.b16 %v1906
        %v2039 = vunpack.c.l.b16 %v1907
        %v2040 = vunpack.c.l.b16 %v1908
        %v2041 = vunpack.c.l.b16 %v1909
        %v2042 = vunpack.c.l.b16 %v1910
        %v2043 = vunpack.c.l.b16 %v1911
        %v2044 = vunpack.c.l.b16 %v1912
        %v2045 = vunpack.c.l.b16 %v1913
        %v2046 = vunpack.c.l.b16 %v1914
        %v2047 = vunpack.c.l.b16 %v1915
        %v2048 = vunpack.c.l.b16 %v1916
        %v2049 = vunpack.c.l.b16 %v1917
        %v2050 = vunpack.c.l.b16 %v1918
        %v2051 = vunpack.c.l.b16 %v1919
        %v2052 = vunpack.c.l.b16 %v1920
        %v2053 = vunpack.c.l.b16 %v1921
        %v2054 = vpack.c.b16 %v1991, %v1990
        %v2055 = vpack.c.b16 %v1993, %v1992
        %v2056 = vpack.c.b16 %v1995, %v1994
        %v2057 = vpack.c.b16 %v1997, %v1996
        %v2058 = vpack.c.b16 %v1999, %v1998
        %v2059 = vpack.c.b16 %v2001, %v2000
        %v2060 = vpack.c.b16 %v2003, %v2002
        %v2061 = vpack.c.b16 %v2005, %v2004
        %v2062 = vpack.c.b16 %v2007, %v2006
        %v2063 = vpack.c.b16 %v2009, %v2008
        %v2064 = vpack.c.b16 %v2011, %v2010
        %v2065 = vpack.c.b16 %v2013, %v2012
        %v2066 = vpack.c.b16 %v2015, %v2014
        %v2067 = vpack.c.b16 %v2017, %v2016
        %v2068 = vpack.c.b16 %v2019, %v2018
        %v2069 = vpack.c.b16 %v2021, %v2020
        %v2070 = vpack.c.b16 %v2023, %v2022
        %v2071 = vpack.c.b16 %v2025, %v2024
        %v2072 = vpack.c.b16 %v2027, %v2026
        %v2073 = vpack.c.b16 %v2029, %v2028
        %v2074 = vpack.c.b16 %v2031, %v2030
        %v2075 = vpack.c.b16 %v2033, %v2032
        %v2076 = vpack.c.b16 %v2035, %v2034
        %v2077 = vpack.c.b16 %v2037, %v2036
        %v2078 = vpack.c.b16 %v2039, %v2038
        %v2079 = vpack.c.b16 %v2041, %v2040
        %v2080 = vpack.c.b16 %v2043, %v2042
        %v2081 = vpack.c.b16 %v2045, %v2044
        %v2082 = vpack.c.b16 %v2047, %v2046
        %v2083 = vpack.c.b16 %v2049, %v2048
        %v2084 = vpack.c.b16 %v2051, %v2050
        %v2085 = vpack.c.b16 %v2053, %v2052
        %2118 = vmatpush.bf16.msra.mxu0 %v2061
        %2119 = vmatpush.bf16.msra.mxu0 %v2060
        %2120 = vmatpush.bf16.msra.mxu0 %v2059
        %2121 = vmatpush.bf16.msra.mxu0 %v2058
        %2122 = vmatpush.bf16.msra.mxu0 %v2057
        %2123 = vmatpush.bf16.msra.mxu0 %v2056
        %2124 = vmatpush.bf16.msra.mxu0 %v2055
        %2125 = vmatpush.bf16.msra.mxu0 %v2054
        %2126 = vmatmul.bf16.gmra.mxu0 %v1854
        %v2127 = vpop.f32.mrf.mxu0
        %v2128 = vadd.f32 %v1924, %v2127
        %v2129 = vpop.f32.mrf.mxu0
        %v2130 = vadd.f32 %v1924, %v2129
        %2131 = vdwg.mxu0
        %2132 = vmatpush.bf16.msra.mxu0 %v2069
        %2133 = vmatpush.bf16.msra.mxu0 %v2068
        %2134 = vmatpush.bf16.msra.mxu0 %v2067
        %2135 = vmatpush.bf16.msra.mxu0 %v2066
        %2136 = vmatpush.bf16.msra.mxu0 %v2065
        %2137 = vmatpush.bf16.msra.mxu0 %v2064
        %2138 = vmatpush.bf16.msra.mxu0 %v2063
        %2139 = vmatpush.bf16.msra.mxu0 %v2062
        %2140 = vmatmul.bf16.gmra.mxu0 %v1855
        %v2141 = vpop.f32.mrf.mxu0
        %v2142 = vadd.f32 %v2128, %v2141
        %v2143 = vpop.f32.mrf.mxu0
        %v2144 = vadd.f32 %v2130, %v2143
        %2145 = vdwg.mxu0
        %2146 = vmatpush.bf16.msra.mxu0 %v2077
        %2147 = vmatpush.bf16.msra.mxu0 %v2076
        %2148 = vmatpush.bf16.msra.mxu0 %v2075
        %2149 = vmatpush.bf16.msra.mxu0 %v2074
        %2150 = vmatpush.bf16.msra.mxu0 %v2073
        %2151 = vmatpush.bf16.msra.mxu0 %v2072
        %2152 = vmatpush.bf16.msra.mxu0 %v2071
        %2153 = vmatpush.bf16.msra.mxu0 %v2070
        %2154 = vmatmul.bf16.gmra.mxu0 %v1856
        %v2155 = vpop.f32.mrf.mxu0
        %v2156 = vadd.f32 %v2142, %v2155
        %v2157 = vpop.f32.mrf.mxu0
        %v2158 = vadd.f32 %v2144, %v2157
        %2159 = vdwg.mxu0
        %2160 = vmatpush.bf16.msra.mxu0 %v2085
        %2161 = vmatpush.bf16.msra.mxu0 %v2084
        %2162 = vmatpush.bf16.msra.mxu0 %v2083
        %2163 = vmatpush.bf16.msra.mxu0 %v2082
        %2164 = vmatpush.bf16.msra.mxu0 %v2081
        %2165 = vmatpush.bf16.msra.mxu0 %v2080
        %2166 = vmatpush.bf16.msra.mxu0 %v2079
        %2167 = vmatpush.bf16.msra.mxu0 %v2078
        %2168 = vmatmul.bf16.gmra.mxu0 %v1857
        %v2169 = vpop.f32.mrf.mxu0
        %v2170 = vadd.f32 %v2156, %v2169
        %v2171 = vpop.f32.mrf.mxu0
        %v2172 = vadd.f32 %v2158, %v2171
        %2173 = vdwg.mxu0
        %v2174 = vtanh.pop %v2170
        %v2175 = vtanh.pop %v2172
        %v2176 = vpack.c.bf16 %v2175, %v2174
        %v2177 = vld [vmem:[%s9] sm:$0xf]
        %v2178 = vld [vmem:[%s9 + $0x4] sm:$0xf]
        %v2179 = vld [vmem:[%s9 + $0x8] sm:$0xf]
        %v2180 = vld [vmem:[%s9 + $0xc] sm:$0xf]
        %v2181 = vld [vmem:[%s9 + $0x10] sm:$0xf]
        %v2182 = vld [vmem:[%s9 + $0x14] sm:$0xf]
        %v2183 = vld [vmem:[%s9 + $0x18] sm:$0xf]
        %v2184 = vld [vmem:[%s9 + $0x1c] sm:$0xf]
        %v2185 = vld [vmem:[%s9 + $0x20] sm:$0xf]
        %v2186 = vld [vmem:[%s9 + $0x24] sm:$0xf]
        %v2187 = vld [vmem:[%s9 + $0x28] sm:$0xf]
        %v2188 = vld [vmem:[%s9 + $0x2c] sm:$0xf]
        %v2189 = vld [vmem:[%s9 + $0x30] sm:$0xf]
        %v2190 = vld [vmem:[%s9 + $0x34] sm:$0xf]
        %v2191 = vld [vmem:[%s9 + $0x38] sm:$0xf]
        %v2192 = vld [vmem:[%s9 + $0x3c] sm:$0xf]
        %v2193 = vld [vmem:[#allocation5] sm:$0x1]
        %v2195 = vperm.slane %v2193, 0
        %v2213 = vunpack.c.l.b16 %v2177
        %v2214 = vunpack.c.l.b16 %v2178
        %v2215 = vunpack.c.l.b16 %v2179
        %v2216 = vunpack.c.l.b16 %v2180
        %v2217 = vunpack.c.l.b16 %v2181
        %v2218 = vunpack.c.l.b16 %v2182
        %v2219 = vunpack.c.l.b16 %v2183
        %v2220 = vunpack.c.l.b16 %v2184
        %v2221 = vunpack.c.l.b16 %v2185
        %v2222 = vunpack.c.l.b16 %v2186
        %v2223 = vunpack.c.l.b16 %v2187
        %v2224 = vunpack.c.l.b16 %v2188
        %v2225 = vunpack.c.l.b16 %v2189
        %v2226 = vunpack.c.l.b16 %v2190
        %v2227 = vunpack.c.l.b16 %v2191
        %v2228 = vunpack.c.l.b16 %v2192
        %v2229 = vpack.c.b16 %v2214, %v2213
        %v2230 = vpack.c.b16 %v2216, %v2215
        %v2231 = vpack.c.b16 %v2218, %v2217
        %v2232 = vpack.c.b16 %v2220, %v2219
        %v2233 = vpack.c.b16 %v2222, %v2221
        %v2234 = vpack.c.b16 %v2224, %v2223
        %v2235 = vpack.c.b16 %v2226, %v2225
        %v2236 = vpack.c.b16 %v2228, %v2227
        %2245 = vmatpush.bf16.msra.mxu0 %v2236
        %2246 = vmatpush.bf16.msra.mxu0 %v2235
        %2247 = vmatpush.bf16.msra.mxu0 %v2234
        %2248 = vmatpush.bf16.msra.mxu0 %v2233
        %2249 = vmatpush.bf16.msra.mxu0 %v2232
        %2250 = vmatpush.bf16.msra.mxu0 %v2231
        %2251 = vmatpush.bf16.msra.mxu0 %v2230
        %2252 = vmatpush.bf16.msra.mxu0 %v2229
        %2253 = vmatmul.bf16.gmra.mxu0 %v2176
        %v2254 = vpop.f32.mrf.mxu0
        %v2255 = vadd.f32 %v2195, %v2254
        %v2256 = vpop.f32.mrf.mxu0
        %v2257 = vadd.f32 %v2195, %v2256
        %2258 = vdwg.mxu0
        %s2259 = smul.u32 %s36, 16
        %v2260 = vlaneseq
        %v2261 = vshrl.u32 %v2260, 7
        %v2262 = vadd.s32 %v2261, 8
        %v2263 = vstv %s2259
        %v2264 = vadd.s32 %v2263, %v2261
        %v2265 = vadd.s32 %v2263, %v2262
        %vm2266 = vcmp.lt.s32.totalorder %v2264, 24
        %vm2267 = vcmp.lt.s32.totalorder %v2265, 24
        %v2268 = vsel %vm2266, %v2255, -1e+30
        %v2269 = vsel %vm2267, %v2257, -1e+30
        %v2270 = vld [vmem:[#allocation2] sm:$0x1]
        %vm2271 = vcmask 7168
        %v2272 = vsel %vm2271, %v2268, -inf
        %v2273 = vsel %vm2271, %v2269, -inf
        %v2274 = vmax.f32 %v2272, %v2273
        %v2275 = vrot.slane %v2274, 4
        %v2276 = vmax.f32 %v2274, %v2275
        %v2277 = vrot.slane %v2276, 2
        %v2278 = vmax.f32 %v2276, %v2277
        %v2279 = vrot.slane %v2278, 1
        %v2280 = vmax.f32 %v2278, %v2279
        %v2281 = vmax.f32 %v2270, %v2280
        %v2282 = vsub.f32 %v2270, %v2281
        %v2283 = vmul.f32 %v2282, 1.442695
        %v2284 = vpow.pop %v2283
        %v2286 = vperm.slane %v2281, 0
        %v2288 = vsub.f32 %v2268, %v2286
        %v2289 = vsub.f32 %v2269, %v2286
        %v2290 = vmul.f32 %v2288, 1.442695
        %v2291 = vpow.pop %v2290
        %v2292 = vmul.f32 %v2289, 1.442695
        %v2293 = vpow.pop %v2292
        %v2294 = vld [vmem:[#allocation3] sm:$0x1]
        %v2295 = vmul.f32 %v2284, %v2294
        %v2296 = vsel %vm2271, %v2291, 0.0
        %v2297 = vsel %vm2271, %v2293, 0.0
        %v2298 = vadd.f32 %v2296, %v2297
        %v2299 = vrot.slane %v2298, 4
        %v2300 = vadd.f32 %v2298, %v2299
        %v2301 = vrot.slane %v2300, 2
        %v2302 = vadd.f32 %v2300, %v2301
        %v2303 = vrot.slane %v2302, 1
        %v2304 = vadd.f32 %v2302, %v2303
        %v2305 = vadd.f32 %v2295, %v2304
        %vm2306 = vcmask 0
        %2307 = vst.msk [vmem:[#allocation3] sm:$0x1] %vm2306, %v2305
        %v2308 = vld [vmem:[#allocation4] sm:$0xf]
        %2310 = vset.pattern.permute.xlu0 0
        %2311 = vperm.xlu0 %2310, %v2284
        %v2312 = vpop.permute.xlu0 %2311
        %v2314 = vperm.slane %v2312, 0
        %v2315 = vmul.f32 %v2314, %v2308
        %v2316 = vpack.c.bf16 %v2293, %v2291
        %v2318 = vunpack.c.l.b16 %v2316
        %v2319 = vunpack.c.h.b16 %v2316
        %2320 = vset.pattern.permute.xlu0 0
        %2321 = vperm.xlu0 %2320, %v2318
        %v2322 = vpop.permute.xlu0 %2321
        %2323 = vset.pattern.permute.xlu0 0
        %2324 = vperm.xlu0 %2323, %v2319
        %v2325 = vpop.permute.xlu0 %2324
        %v2326 = vlaneseq
        %v2327 = vand.u32 %v2326, 127
        %v2328 = vperm.slane %v2322, %v2327
        %v2329 = vadd.s32 %v2327, 4294967288
        %v2330 = vperm.slane %v2325, %v2329
        %vm2331 = vcmask 130112
        %v2332 = vsel %vm2331, %v2330, %v2328
        %v2333 = vpack.c.b16 %v2332, %v2332
        %vm2334 = vcmask 130048
        %v2336 = vsel %vm2334, %v2333, 0
        %2338 = vmatpush.bf16.msra.mxu0 0
        %2339 = vmatpush.bf16.msra.mxu0 0
        %2340 = vmatpush.bf16.msra.mxu0 0
        %2341 = vmatpush.bf16.msra.mxu0 0
        %2342 = vmatpush.bf16.msra.mxu0 0
        %2343 = vmatpush.bf16.msra.mxu0 0
        %2344 = vmatpush.bf16.msra.mxu0 0
        %2345 = vmatpush.bf16.msra.mxu0 %v1854
        %2346 = vmatmul.bf16.gmra.mxu0 %v2336
        %v2347 = vpop.f32.mrf.mxu0
        %v2348 = vadd.f32 0.0, %v2347
        %v2349 = vpop.f32.mrf.mxu0
        %2350 = vdwg.mxu0
        %2351 = vmatpush.bf16.msra.mxu0 0
        %2352 = vmatpush.bf16.msra.mxu0 0
        %2353 = vmatpush.bf16.msra.mxu0 0
        %2354 = vmatpush.bf16.msra.mxu0 0
        %2355 = vmatpush.bf16.msra.mxu0 0
        %2356 = vmatpush.bf16.msra.mxu0 0
        %2357 = vmatpush.bf16.msra.mxu0 0
        %2358 = vmatpush.bf16.msra.mxu0 %v1855
        %2359 = vmatmul.bf16.gmra.mxu0 %v2336
        %v2360 = vpop.f32.mrf.mxu0
        %v2361 = vadd.f32 0.0, %v2360
        %v2362 = vpop.f32.mrf.mxu0
        %2363 = vdwg.mxu0
        %2364 = vmatpush.bf16.msra.mxu0 0
        %2365 = vmatpush.bf16.msra.mxu0 0
        %2366 = vmatpush.bf16.msra.mxu0 0
        %2367 = vmatpush.bf16.msra.mxu0 0
        %2368 = vmatpush.bf16.msra.mxu0 0
        %2369 = vmatpush.bf16.msra.mxu0 0
        %2370 = vmatpush.bf16.msra.mxu0 0
        %2371 = vmatpush.bf16.msra.mxu0 %v1856
        %2372 = vmatmul.bf16.gmra.mxu0 %v2336
        %v2373 = vpop.f32.mrf.mxu0
        %v2374 = vadd.f32 0.0, %v2373
        %v2375 = vpop.f32.mrf.mxu0
        %2376 = vdwg.mxu0
        %2377 = vmatpush.bf16.msra.mxu0 0
        %2378 = vmatpush.bf16.msra.mxu0 0
        %2379 = vmatpush.bf16.msra.mxu0 0
        %2380 = vmatpush.bf16.msra.mxu0 0
        %2381 = vmatpush.bf16.msra.mxu0 0
        %2382 = vmatpush.bf16.msra.mxu0 0
        %2383 = vmatpush.bf16.msra.mxu0 0
        %2384 = vmatpush.bf16.msra.mxu0 %v1857
        %2385 = vmatmul.bf16.gmra.mxu0 %v2336
        %v2386 = vpop.f32.mrf.mxu0
        %v2387 = vadd.f32 0.0, %v2386
        %v2388 = vpop.f32.mrf.mxu0
        %2389 = vdwg.mxu0
        %v2394 = vrot.slane %v2361, 7
        %v2395 = vrot.slane %v2374, 6
        %v2396 = vrot.slane %v2387, 5
        %vm2397 = vcmask 1040384
        %v2398 = vsel %vm2397, %v2348, %v2394
        %vm2399 = vcmask 1042434
        %v2400 = vsel %vm2399, %v2395, %v2396
        %vm2401 = vcmask 1041408
        %v2402 = vsel %vm2401, %v2398, %v2400
        %v2404 = vadd.f32 %v2315, %v2402
        %v2405 = vlaneseq
        %vm2406 = vcmp.ge.s32.totalorder %v2405, 0
        %vm2407 = vcmp.lt.s32.totalorder %v2405, 512
        %vm2408 = vmand %vm2406, %vm2407
        %2409 = vst.msk [vmem:[#allocation4] sm:$0xf] %vm2408, %v2404
        %2410 = vst.msk [vmem:[#allocation2] sm:$0x1] %vm2306, %v2281
        %p2411 = scmp.eq.s32.totalorder %s36, 1
        // Predicated region
        $region81: #{tpu_custom_call.1} parent=63 // pred_check
          %p2412 = pneg %p2411
        $region82: #{tpu_custom_call.1} parent=63 // pred_check_branch
          %2414 = sbr.rel (%p2412) target = $region84
        $region83: #{tpu_custom_call.1} parent=63 // pred_region
          %v2415 = vld [vmem:[#allocation4] sm:$0xf]
          %v2416 = vld [vmem:[#allocation3] sm:$0x1]
          %v2417 = vrcp.pop %v2416
          %v2418 = vmul.f32 %v2416, %v2417
          %v2419 = vsub.f32 1.0, %v2418
          %v2420 = vmul.f32 %v2417, %v2419
          %v2421 = vadd.f32 %v2417, %v2420
          %vm2422 = vweird.f32 %v2416
          %vm2423 = vweird.f32 %v2417
          %vm2424 = vmor %vm2422, %vm2423
          %v2425 = vsel %vm2424, %v2417, %v2421
          %v2426 = vand.u32 2147483647, %v2416
          %vm2427 = vcmp.eq.f32.partialorder %v2426, 8.507059e+37
          %v2428 = vand.u32 %v2416, 2147483648
          %v2429 = vor.u32 1.1754944e-38, %v2428
          %v2430 = vsel %vm2427, %v2429, %v2425
          %v2431 = vmul.f32 1.0, %v2430
          %2433 = vset.pattern.permute.xlu0 0
          %2434 = vperm.xlu0 %2433, %v2431
          %v2435 = vpop.permute.xlu0 %2434
          %v2437 = vperm.slane %v2435, 0
          %v2438 = vmul.f32 %v2415, %v2437
          %2439 = vst.msk [vmem:[%s458] sm:$0xf] %vm2408, %v2438
        $region84: #{tpu_custom_call.1} parent=63 // pred_fallthru
          _
        %s2440 = sand.u32 %s289, 1
        %s2441 = scalar_lea.sflag [#allocation8], %s2440
        %s2442 = sand.u32 %s289, 1
        %s2443 = smul.addr %s2442, 4
        %s2444 = scalar_lea.vmem [#allocation12], %s2443
        // Predicated region
        $region85: #{tpu_custom_call.1} parent=63 // pred_check
          %p2445 = pneg %p299
        $region86: #{tpu_custom_call.1} parent=63 // pred_check_branch
          %2447 = sbr.rel (%p2445) target = $region88
        $region87: #{tpu_custom_call.1} parent=63 // pred_region
          %2449 = vsyncadd %s2441, 0
          %s2450 = smul.addr %s35, 4
          %s2451 = scalar_lea.hbm %s11, %s2450
          %s2453 = sshll.u32 %s2444, 4
          %s2454 = int_to_ptr.vmem [resolvable:$true] %s2453
          %s2455 = sshll.u32 %s2451, 4
          %s2456 = int_to_ptr.hbm [resolvable:$true] %s2455
          %2458 = dma.vmem_to_hbm [thread:$0]  %s2454, 64, %s2456, %s2441
        $region88: #{tpu_custom_call.1} parent=63 // pred_fallthru
          _
      $region64: #{tpu_custom_call.1} parent=5 // pred_fallthru
        _
      %p2459 = scmp.le.s32.totalorder 2, %s26
      // Predicated region
      $region89: #{tpu_custom_call.1} parent=5 // pred_check
        %p2460 = pneg %p2459
      $region90: #{tpu_custom_call.1} parent=5 // pred_check_branch
        %2462 = sbr.rel (%p2460) target = $region92
      $region91: #{tpu_custom_call.1} parent=5 // pred_region
        %s2463 = ssub.s32 %s26, 2
        // Predicated region
        $region93: #{tpu_custom_call.1} parent=91 // pred_check
          %p2464 = pneg %p305
        $region94: #{tpu_custom_call.1} parent=91 // pred_check_branch
          %2466 = sbr.rel (%p2464) target = $region96
        $region95: #{tpu_custom_call.1} parent=91 // pred_region
          %s2467 = sand.u32 %s290, 1
          %s2468 = scalar_lea.sflag [#allocation8], %s2467
          %s2469 = sand.u32 %s290, 1
          %s2470 = smul.addr %s2469, 4
          %s2471 = scalar_lea.vmem [#allocation12], %s2470
          %2473 = dma.done %s2468, 64
        $region96: #{tpu_custom_call.1} parent=91 // pred_fallthru
          _
      $region92: #{tpu_custom_call.1} parent=5 // pred_fallthru
        _
    $region6: #{tpu_custom_call.1} parent=1 // loop_footer
      %s30 = sadd.s32 1, %s26
    $region7: #{tpu_custom_call.1} parent=1 // loop_footer_branch
      %25 = sbr.rel target = $region3
    $region8: #{tpu_custom_call.1} parent=1 // loop_exit
      _
    %2474 = vsyncpa [#allocation7], 1
    %s2475 = scalar_lea.sflag [#allocation7], 1
    %2476 = vsyncpa %s2475, 1
    %2477 = vsyncpa [#allocation10], 1
    %2478 = vsyncpa [#allocation8], 1
    %s2479 = scalar_lea.sflag [#allocation8], 1
    %2480 = vsyncpa %s2479, 1

</llo_original>
